<compile_context>
chip_gen: v5e
topology: v5e:2x2
jax: 0.10.0
libtpu: 0.0.40
codegen_flags: <defaults>
</compile_context>

<pallas_src>
import functools

import jax
import jax.numpy as jnp
from jax.experimental import pallas as pl
from jax.experimental.pallas import tpu as pltpu

FP8_DTYPE = jnp.float8_e4m3fn
FP8_MAX = 448.0  # max finite value of float8_e4m3fn ("E4M3" fwbit)

_DEFAULT_TILE_M = 512
_DEFAULT_TILE_K = 512


def _pick_tile(dim, pref):
    """Largest legal tile: full dim if small, else a multiple of 128 <= pref.

    Both outputs (W_fp8 and W_fp8^T) see each tile dim in *both* sublane and
    lane position, so a non-full tile dim must be a multiple of 128.
    """
    if dim <= pref:
        return dim
    return max(128, (pref // 128) * 128)


# ---------------------------------------------------------------------------
# Pass 1: per-block |W| max (independent partials -> fully parallel grid)
# ---------------------------------------------------------------------------
def _partial_amax_kernel(w_ref, pmax_ref, *, m, k, need_mask):
    # abs/max in the weight's native dtype (bf16 stays bf16 on v6e/v7x VPUs);
    # only the per-block scalar is promoted to f32.
    a = jnp.abs(w_ref[...])
    if need_mask:
        tm, tk = a.shape
        i = pl.program_id(0)
        j = pl.program_id(1)
        rows = jax.lax.broadcasted_iota(jnp.int32, (tm, tk), 0) + i * tm
        cols = jax.lax.broadcasted_iota(jnp.int32, (tm, tk), 1) + j * tk
        a = jnp.where((rows < m) & (cols < k), a, jnp.zeros_like(a))
    blk_max = jnp.max(a).astype(jnp.float32)
    # Lane-dense (8, 128) partial tile per block (full unmasked vst).
    pmax_ref[...] = jnp.full(pmax_ref.shape, blk_max, dtype=jnp.float32)


# ---------------------------------------------------------------------------
# Pass 2: divide by scale, cast to fp8, emit W_fp8 tile and its transpose
# ---------------------------------------------------------------------------
def _quant_transpose_kernel(scale_ref, w_ref, wq_ref, wqt_ref):
    s = scale_ref[0, 0]
    inv_s = jnp.where(s > 0, jnp.float32(1.0) / s, jnp.float32(0.0))
    y = w_ref[...].astype(jnp.float32) * inv_s
    y = jnp.clip(y, -FP8_MAX, FP8_MAX)
    wq_ref[...] = y.astype(FP8_DTYPE)
    # Transpose the f32 tile (XLU slot, hidden under DMA), then cast.
    # TODO(synk): downstream fp8 matmuls could consume W_fp8 with swapped
    # contraction dims and skip materializing W_fp8^T entirely; kept here for
    # API parity with COAT's fp8_division_transpose.
    wqt_ref[...] = y.T.astype(FP8_DTYPE)


# ---------------------------------------------------------------------------
# fp8_division_transpose (per-tensor scale, E4M3)
# ---------------------------------------------------------------------------
@functools.partial(jax.jit,
                   static_argnames=("group_size", "fwbit", "tile_m", "tile_k"))
def fp8_division_transpose(weight, group_size=16, fwbit="E4M3",
                           tile_m=_DEFAULT_TILE_M, tile_k=_DEFAULT_TILE_K):
    # COAT uses a single per-tensor scale for weights; group_size (QB) is
    # accepted for API parity and intentionally unused.
    del group_size, fwbit
    M, K = weight.shape
    tm = _pick_tile(M, tile_m)
    tk = _pick_tile(K, tile_k)
    gm = pl.cdiv(M, tm)
    gk = pl.cdiv(K, tk)
    need_mask = (M % tm != 0) or (K % tk != 0)

    # ---- Pass 1: parallel tiled abs-max -> lane-dense per-block partials ----
    partial = pl.pallas_call(
        functools.partial(_partial_amax_kernel, m=M, k=K, need_mask=need_mask),
        out_shape=jax.ShapeDtypeStruct((gm * 8, gk * 128), jnp.float32),
        grid=(gm, gk),
        in_specs=[pl.BlockSpec((tm, tk), lambda i, j: (i, j))],
        out_specs=pl.BlockSpec((8, 128), lambda i, j: (i, j)),
        compiler_params=pltpu.CompilerParams(
            dimension_semantics=("parallel", "parallel"),
            vmem_limit_bytes=32 * 1024 * 1024),
    )(weight)
    # Tiny finalize in plain XLA (runs at roofline for this trivial reduce).
    scale = (jnp.max(partial) / jnp.float32(FP8_MAX)).reshape(1, 1)

    # ---- Pass 2: tiled, double-buffered quantize + transpose ----
    w_fp8, w_fp8_t = pl.pallas_call(
        _quant_transpose_kernel,
        out_shape=(
            jax.ShapeDtypeStruct((M, K), FP8_DTYPE),
            jax.ShapeDtypeStruct((K, M), FP8_DTYPE),
        ),
        grid=(gm, gk),
        in_specs=[
            pl.BlockSpec(memory_space=pltpu.MemorySpace.SMEM),   # scale (1,1)
            pl.BlockSpec((tm, tk), lambda i, j: (i, j)),         # W tile
        ],
        out_specs=(
            pl.BlockSpec((tm, tk), lambda i, j: (i, j)),         # W_fp8
            pl.BlockSpec((tk, tm), lambda i, j: (j, i)),         # W_fp8^T
        ),
        compiler_params=pltpu.CompilerParams(
            dimension_semantics=("parallel", "parallel"),
            vmem_limit_bytes=32 * 1024 * 1024),
    )(scale, weight)

    return w_fp8, scale, w_fp8_t


# ---------------------------------------------------------------------------
# Module mirroring FP8CacheWeightModule
# ---------------------------------------------------------------------------
class QArgs:
    def __init__(self, group_size=16, weight_memory_efficient=True):
        self.group_size = group_size
        self.weight_memory_efficient = weight_memory_efficient


class FP8CacheWeightModule:
    def __init__(self, config, qargs, layer_id):
        self.config = config
        self.qargs = qargs
        self.layer_id = layer_id
        self.fwobits = {"fwbit": "E4M3"}

    def prepare_weight(self, weight, weight_name, is_first_microbatch):
        if is_first_microbatch:
            weight_fp8, weight_s, weight_fp8_t = fp8_division_transpose(
                weight, self.qargs.group_size, self.fwobits["fwbit"])
            if self.qargs.weight_memory_efficient:
                setattr(self, f"{weight_name}_fp8_scale", weight_s)
                return weight_fp8, weight_fp8_t, weight_s
            else:
                setattr(self, f"{weight_name}_fp8", weight_fp8)
                setattr(self, f"{weight_name}_fp8_t", weight_fp8_t)
                setattr(self, f"{weight_name}_fp8_scale", weight_s)
                return weight_fp8, weight_fp8_t, weight_s
        elif self.qargs.weight_memory_efficient:
            return getattr(self, f"{weight_name}_fp8_scale")
        else:
            return (getattr(self, f"{weight_name}_fp8"),
                    getattr(self, f"{weight_name}_fp8_t"),
                    getattr(self, f"{weight_name}_fp8_scale"))

    def forward(self, x):
        # Reference forward() is `pass` (no compute).
        return None


# ---------------------------------------------------------------------------
def _check(weight, w_fp8, scale, w_fp8_t):
    weight_f32 = weight.astype(jnp.float32)
    amax = jnp.max(jnp.abs(weight_f32))
    ref_scale = amax / jnp.float32(FP8_MAX)

    assert w_fp8.dtype == FP8_DTYPE and w_fp8_t.dtype == FP8_DTYPE
    assert w_fp8.shape == weight.shape
    assert w_fp8_t.shape == weight.shape[::-1]
    assert jnp.allclose(scale[0, 0], ref_scale, rtol=1e-6)

    inv = jnp.where(ref_scale > 0, jnp.float32(1.0) / ref_scale,
                    jnp.float32(0.0))
    ref_q = jnp.clip(weight_f32 * inv, -FP8_MAX, FP8_MAX).astype(FP8_DTYPE)
    mismatch = jnp.mean(
        (w_fp8.astype(jnp.float32) != ref_q.astype(jnp.float32))
        .astype(jnp.float32))
    assert float(mismatch) < 1e-3

    assert jnp.array_equal(w_fp8_t.astype(jnp.float32),
                           w_fp8.astype(jnp.float32).T)
    dequant = w_fp8.astype(jnp.float32) * scale[0, 0]
    assert float(jnp.max(jnp.abs(dequant - weight_f32))) <= float(amax) * 0.07


if __name__ == "__main__":
    key = jax.random.PRNGKey(0)
    out_features, in_features = 256, 384
    weight = jax.random.normal(key, (out_features, in_features), jnp.float32)

    module = FP8CacheWeightModule(
        config=None,
        qargs=QArgs(group_size=16, weight_memory_efficient=True),
        layer_id=0)

    # Module path (default 512-square tiles -> single-block grid at this size).
    w_fp8, w_fp8_t, w_scale = module.prepare_weight(
        weight, "proj", is_first_microbatch=True)
    jax.block_until_ready((w_fp8, w_fp8_t, w_scale))
    _check(weight, w_fp8, w_scale, w_fp8_t)

    # Cached path (not first microbatch -> returns cached scale only).
    cached_scale = module.prepare_weight(weight, "proj",
                                         is_first_microbatch=False)
    jax.block_until_ready(cached_scale)
    assert jnp.array_equal(cached_scale, w_scale)

    # Multi-block path: small 128x128 tiles -> (2, 3) grid, bf16 weight.
    weight_bf16 = jax.random.normal(
        jax.random.PRNGKey(1), (out_features, in_features), jnp.bfloat16)
    w2_fp8, w2_scale, w2_fp8_t = fp8_division_transpose(
        weight_bf16, tile_m=128, tile_k=128)
    jax.block_until_ready((w2_fp8, w2_scale, w2_fp8_t))
    _check(weight_bf16, w2_fp8, w2_scale, w2_fp8_t)

    print("KERNEL_OK")
</pallas_src>

<mosaic_0001>
module attributes {stable_mosaic.version = 11 : i64} {
  func.func @_partial_amax_kernel(%arg0: i32, %arg1: i32, %arg2: memref<256x384xf32, #tpu.memory_space<vmem>>, %arg3: memref<8x128xf32, #tpu.memory_space<vmem>>) attributes {dimension_semantics = [#tpu.dimension_semantics<parallel>, #tpu.dimension_semantics<parallel>], iteration_bounds = array<i64: 1, 1>, scalar_prefetch = 0 : i64, scratch_operands = 0 : i64, tpu.core_type = #tpu.core_type<tc>, window_params = [{transform_indices = @transform_0, window_bounds = array<i64: 256, 384>}, {transform_indices = @transform_1, window_bounds = array<i64: 8, 128>}]} {
    %c0 = arith.constant 0 : index
    %c0_0 = arith.constant 0 : index
    %0 = vector.load %arg2[%c0, %c0_0] : memref<256x384xf32, #tpu.memory_space<vmem>>, vector<256x384xf32>
    %1 = math.absf %0 : vector<256x384xf32>
    %2 = vector.shape_cast %1 : vector<256x384xf32> to vector<1x256x384xf32>
    %cst = arith.constant dense<0xFF800000> : vector<1xf32>
    %3 = vector.multi_reduction <maximumf>, %2, %cst [1, 2] : vector<1x256x384xf32> to vector<1xf32>
    %4 = vector.shape_cast %3 : vector<1xf32> to vector<1x1x1xf32>
    %5 = vector.extract %4[0, 0, 0] : f32 from vector<1x1x1xf32>
    %6 = vector.broadcast %5 : f32 to vector<8x128xf32>
    %c0_1 = arith.constant 0 : index
    %c0_2 = arith.constant 0 : index
    %7 = vector.load %arg3[%c0_1, %c0_2] : memref<8x128xf32, #tpu.memory_space<vmem>>, vector<8x128xf32>
    tpu.vector_store %arg3[%c0_1, %c0_2], %6 {strides = array<i32>} : memref<8x128xf32, #tpu.memory_space<vmem>>, vector<8x128xf32>,
    return
  }
  func.func @transform_0(%arg0: i32, %arg1: i32) -> (i32, i32) {
    %c0_i32 = arith.constant 0 : i32
    return %arg0, %arg1 : i32, i32
  }
  func.func @transform_1(%arg0: i32, %arg1: i32) -> (i32, i32) {
    %c0_i32 = arith.constant 0 : i32
    return %arg0, %arg1 : i32, i32
  }
}

module attributes {stable_mosaic.version = 11 : i64} {
  func.func @_quant_transpose_kernel(%arg0: i32, %arg1: i32, %arg2: memref<1x1xf32, #tpu.memory_space<smem>>, %arg3: memref<256x384xf32, #tpu.memory_space<vmem>>, %arg4: memref<256x384xf8E4M3FN, #tpu.memory_space<vmem>>, %arg5: memref<384x256xf8E4M3FN, #tpu.memory_space<vmem>>) attributes {dimension_semantics = [#tpu.dimension_semantics<parallel>, #tpu.dimension_semantics<parallel>], iteration_bounds = array<i64: 1, 1>, scalar_prefetch = 0 : i64, scratch_operands = 0 : i64, tpu.core_type = #tpu.core_type<tc>, window_params = [{transform_indices = @transform_0, window_bounds = array<i64: 1, 1>}, {transform_indices = @transform_1, window_bounds = array<i64: 256, 384>}, {transform_indices = @transform_2, window_bounds = array<i64: 256, 384>}, {transform_indices = @transform_3, window_bounds = array<i64: 384, 256>}]} {
    %c0 = arith.constant 0 : index
    %c0_0 = arith.constant 0 : index
    %0 = memref.load %arg2[%c0, %c0_0] : memref<1x1xf32, #tpu.memory_space<smem>>
    %cst = arith.constant 0.000000e+00 : f32
    %1 = arith.cmpf ogt, %0, %cst : f32
    %cst_1 = arith.constant 1.000000e+00 : f32
    %2 = arith.divf %cst_1, %0 : f32
    %cst_2 = arith.constant 0.000000e+00 : f32
    %3 = arith.select %1, %2, %cst_2 : f32
    %c0_3 = arith.constant 0 : index
    %c0_4 = arith.constant 0 : index
    %4 = vector.load %arg3[%c0_3, %c0_4] : memref<256x384xf32, #tpu.memory_space<vmem>>, vector<256x384xf32>
    %5 = vector.broadcast %3 : f32 to vector<256x384xf32>
    %6 = arith.mulf %4, %5 : vector<256x384xf32>
    %cst_5 = arith.constant -4.480000e+02 : f32
    %cst_6 = arith.constant 4.480000e+02 : f32
    %7 = vector.broadcast %cst_5 : f32 to vector<256x384xf32>
    %8 = arith.maximumf %7, %6 : vector<256x384xf32>
    %9 = vector.broadcast %cst_6 : f32 to vector<256x384xf32>
    %10 = arith.minimumf %9, %8 : vector<256x384xf32>
    %11 = arith.truncf %10 : vector<256x384xf32> to vector<256x384xf8E4M3FN>
    %c0_7 = arith.constant 0 : index
    %c0_8 = arith.constant 0 : index
    %12 = vector.load %arg4[%c0_7, %c0_8] : memref<256x384xf8E4M3FN, #tpu.memory_space<vmem>>, vector<256x384xf8E4M3FN>
    tpu.vector_store %arg4[%c0_7, %c0_8], %11 {strides = array<i32>} : memref<256x384xf8E4M3FN, #tpu.memory_space<vmem>>, vector<256x384xf8E4M3FN>,
    %13 = tpu.transpose %10, [1, 0] : vector<256x384xf32> -> vector<384x256xf32>
    %14 = arith.truncf %13 : vector<384x256xf32> to vector<384x256xf8E4M3FN>
    %c0_9 = arith.constant 0 : index
    %c0_10 = arith.constant 0 : index
    %15 = vector.load %arg5[%c0_9, %c0_10] : memref<384x256xf8E4M3FN, #tpu.memory_space<vmem>>, vector<384x256xf8E4M3FN>
    tpu.vector_store %arg5[%c0_9, %c0_10], %14 {strides = array<i32>} : memref<384x256xf8E4M3FN, #tpu.memory_space<vmem>>, vector<384x256xf8E4M3FN>,
    return
  }
  func.func @transform_0(%arg0: i32, %arg1: i32) -> (i32, i32) {
    %c0_i32 = arith.constant 0 : i32
    %c0_i32_0 = arith.constant 0 : i32
    %c0_i32_1 = arith.constant 0 : i32
    return %c0_i32, %c0_i32_0 : i32, i32
  }
  func.func @transform_1(%arg0: i32, %arg1: i32) -> (i32, i32) {
    %c0_i32 = arith.constant 0 : i32
    return %arg0, %arg1 : i32, i32
  }
  func.func @transform_2(%arg0: i32, %arg1: i32) -> (i32, i32) {
    %c0_i32 = arith.constant 0 : i32
    return %arg0, %arg1 : i32, i32
  }
  func.func @transform_3(%arg0: i32, %arg1: i32) -> (i32, i32) {
    %c0_i32 = arith.constant 0 : i32
    return %arg1, %arg0 : i32, i32
  }
}

</mosaic_0001>

<llo_original>
// kernel: fp8_division_transpose.2
$region0: #{fp8_division_transpose.2}
  #allocation0 [shape = 'u32[]', space=smem, size = 0x4, offset = 0x4, fixed_abs, tag = 'smem constant byte address 0x4 - core index']
  #allocation1 [shape = 'u32[72,128]{1,0:T(1,128)}', space=vmem, size = 0x9000, scoped, tag = 'internal scratch']
  %s0 = inlined_call_operand.hbm [shape: f32[256,384], index: 0, kind: input, shape index: {}]
  %s1 = inlined_call_operand.vmem [shape: f32[8,128], index: 1, kind: output, shape index: {}]
  %s2 = sld [smem:[#allocation0]]
  $region18: #{fp8_division_transpose.2} parent=0
    _
  %s4 = ssub.s32 1, %s2
  %s5 = scalar_select 0, %s4, %s2
  $region1: #{fp8_division_transpose.2} parent=0
    #allocation2 [shape = 'u8[393216]{0}', space=vmem, size = 0x60000, scoped, tag = 'input window, operand 0, single buffered']
    #allocation3 [shape = 's32[1]{0}', space=sflag, size = 0x4, scoped, tag = 'scoped memory for fp8_division_transpose.2']
    %6 = vsyncpa [#allocation3], 0
    // Predicated region
    $region2: #{fp8_division_transpose.2} parent=1 // pred_check
      _
    $region3: #{fp8_division_transpose.2} parent=1 // pred_check_branch
      %8 = sbr.rel (0) target = $region5
    $region4: #{fp8_division_transpose.2} parent=1 // pred_region
      %10 = vsyncadd [#allocation3], 0
      %s11 = sshll.u32 %s0, 4
      %s12 = int_to_ptr.hbm [resolvable:$true] %s11
      %s13 = sshll.u32 [#allocation2], 4
      %s14 = int_to_ptr.vmem [resolvable:$true] %s13
      %19 = dma.hbm_to_vmem [thread:$0]  %s12, 12288, %s14, [#allocation3], 384, 384, 24
    $region5: #{fp8_division_transpose.2} parent=1 // pred_fallthru
      _
    // Predicated region
    $region6: #{fp8_division_transpose.2} parent=1 // pred_check
      _
    $region7: #{fp8_division_transpose.2} parent=1 // pred_check_branch
      %21 = sbr.rel (0) target = $region9
    $region8: #{fp8_division_transpose.2} parent=1 // pred_region
      %23 = dma.done [#allocation3], 12288
    $region9: #{fp8_division_transpose.2} parent=1 // pred_fallthru
      _
    %v24 = vld [vmem:[#allocation2] sm:$0xff]
    %v25 = vld [vmem:[#allocation2 + $0x8] sm:$0xff]
    %v26 = vld [vmem:[#allocation2 + $0x10] sm:$0xff]
    %v27 = vld [vmem:[#allocation2 + $0x18] sm:$0xff]
    %v28 = vld [vmem:[#allocation2 + $0x20] sm:$0xff]
    %v29 = vld [vmem:[#allocation2 + $0x28] sm:$0xff]
    %v30 = vld [vmem:[#allocation2 + $0x30] sm:$0xff]
    %v31 = vld [vmem:[#allocation2 + $0x38] sm:$0xff]
    %v32 = vld [vmem:[#allocation2 + $0x40] sm:$0xff]
    %v33 = vld [vmem:[#allocation2 + $0x48] sm:$0xff]
    %v34 = vld [vmem:[#allocation2 + $0x50] sm:$0xff]
    %v35 = vld [vmem:[#allocation2 + $0x58] sm:$0xff]
    %v36 = vld [vmem:[#allocation2 + $0x60] sm:$0xff]
    %v37 = vld [vmem:[#allocation2 + $0x68] sm:$0xff]
    %v38 = vld [vmem:[#allocation2 + $0x70] sm:$0xff]
    %v39 = vld [vmem:[#allocation2 + $0x78] sm:$0xff]
    %v40 = vld [vmem:[#allocation2 + $0x80] sm:$0xff]
    %v41 = vld [vmem:[#allocation2 + $0x88] sm:$0xff]
    %v42 = vld [vmem:[#allocation2 + $0x90] sm:$0xff]
    %v43 = vld [vmem:[#allocation2 + $0x98] sm:$0xff]
    %v44 = vld [vmem:[#allocation2 + $0xa0] sm:$0xff]
    %v45 = vld [vmem:[#allocation2 + $0xa8] sm:$0xff]
    %v46 = vld [vmem:[#allocation2 + $0xb0] sm:$0xff]
    %v47 = vld [vmem:[#allocation2 + $0xb8] sm:$0xff]
    %v48 = vld [vmem:[#allocation2 + $0xc0] sm:$0xff]
    %v49 = vld [vmem:[#allocation2 + $0xc8] sm:$0xff]
    %v50 = vld [vmem:[#allocation2 + $0xd0] sm:$0xff]
    %v51 = vld [vmem:[#allocation2 + $0xd8] sm:$0xff]
    %v52 = vld [vmem:[#allocation2 + $0xe0] sm:$0xff]
    %v53 = vld [vmem:[#allocation2 + $0xe8] sm:$0xff]
    %v54 = vld [vmem:[#allocation2 + $0xf0] sm:$0xff]
    %v55 = vld [vmem:[#allocation2 + $0xf8] sm:$0xff]
    %v56 = vld [vmem:[#allocation2 + $0x100] sm:$0xff]
    %v57 = vld [vmem:[#allocation2 + $0x108] sm:$0xff]
    %v58 = vld [vmem:[#allocation2 + $0x110] sm:$0xff]
    %v59 = vld [vmem:[#allocation2 + $0x118] sm:$0xff]
    %v60 = vld [vmem:[#allocation2 + $0x120] sm:$0xff]
    %v61 = vld [vmem:[#allocation2 + $0x128] sm:$0xff]
    %v62 = vld [vmem:[#allocation2 + $0x130] sm:$0xff]
    %v63 = vld [vmem:[#allocation2 + $0x138] sm:$0xff]
    %v64 = vld [vmem:[#allocation2 + $0x140] sm:$0xff]
    %v65 = vld [vmem:[#allocation2 + $0x148] sm:$0xff]
    %v66 = vld [vmem:[#allocation2 + $0x150] sm:$0xff]
    %v67 = vld [vmem:[#allocation2 + $0x158] sm:$0xff]
    %v68 = vld [vmem:[#allocation2 + $0x160] sm:$0xff]
    %v69 = vld [vmem:[#allocation2 + $0x168] sm:$0xff]
    %v70 = vld [vmem:[#allocation2 + $0x170] sm:$0xff]
    %v71 = vld [vmem:[#allocation2 + $0x178] sm:$0xff]
    %v72 = vld [vmem:[#allocation2 + $0x180] sm:$0xff]
    %v73 = vld [vmem:[#allocation2 + $0x188] sm:$0xff]
    %v74 = vld [vmem:[#allocation2 + $0x190] sm:$0xff]
    %v75 = vld [vmem:[#allocation2 + $0x198] sm:$0xff]
    %v76 = vld [vmem:[#allocation2 + $0x1a0] sm:$0xff]
    %v77 = vld [vmem:[#allocation2 + $0x1a8] sm:$0xff]
    %v78 = vld [vmem:[#allocation2 + $0x1b0] sm:$0xff]
    %v79 = vld [vmem:[#allocation2 + $0x1b8] sm:$0xff]
    %v80 = vld [vmem:[#allocation2 + $0x1c0] sm:$0xff]
    %v81 = vld [vmem:[#allocation2 + $0x1c8] sm:$0xff]
    %v82 = vld [vmem:[#allocation2 + $0x1d0] sm:$0xff]
    %v83 = vld [vmem:[#allocation2 + $0x1d8] sm:$0xff]
    %v84 = vld [vmem:[#allocation2 + $0x1e0] sm:$0xff]
    %v85 = vld [vmem:[#allocation2 + $0x1e8] sm:$0xff]
    %v86 = vld [vmem:[#allocation2 + $0x1f0] sm:$0xff]
    %v87 = vld [vmem:[#allocation2 + $0x1f8] sm:$0xff]
    %v88 = vld [vmem:[#allocation2 + $0x200] sm:$0xff]
    %v89 = vld [vmem:[#allocation2 + $0x208] sm:$0xff]
    %v90 = vld [vmem:[#allocation2 + $0x210] sm:$0xff]
    %v91 = vld [vmem:[#allocation2 + $0x218] sm:$0xff]
    %v92 = vld [vmem:[#allocation2 + $0x220] sm:$0xff]
    %v93 = vld [vmem:[#allocation2 + $0x228] sm:$0xff]
    %v94 = vld [vmem:[#allocation2 + $0x230] sm:$0xff]
    %v95 = vld [vmem:[#allocation2 + $0x238] sm:$0xff]
    %v96 = vld [vmem:[#allocation2 + $0x240] sm:$0xff]
    %v97 = vld [vmem:[#allocation2 + $0x248] sm:$0xff]
    %v98 = vld [vmem:[#allocation2 + $0x250] sm:$0xff]
    %v99 = vld [vmem:[#allocation2 + $0x258] sm:$0xff]
    %v100 = vld [vmem:[#allocation2 + $0x260] sm:$0xff]
    %v101 = vld [vmem:[#allocation2 + $0x268] sm:$0xff]
    %v102 = vld [vmem:[#allocation2 + $0x270] sm:$0xff]
    %v103 = vld [vmem:[#allocation2 + $0x278] sm:$0xff]
    %v104 = vld [vmem:[#allocation2 + $0x280] sm:$0xff]
    %v105 = vld [vmem:[#allocation2 + $0x288] sm:$0xff]
    %v106 = vld [vmem:[#allocation2 + $0x290] sm:$0xff]
    %v107 = vld [vmem:[#allocation2 + $0x298] sm:$0xff]
    %v108 = vld [vmem:[#allocation2 + $0x2a0] sm:$0xff]
    %v109 = vld [vmem:[#allocation2 + $0x2a8] sm:$0xff]
    %v110 = vld [vmem:[#allocation2 + $0x2b0] sm:$0xff]
    %v111 = vld [vmem:[#allocation2 + $0x2b8] sm:$0xff]
    %v112 = vld [vmem:[#allocation2 + $0x2c0] sm:$0xff]
    %v113 = vld [vmem:[#allocation2 + $0x2c8] sm:$0xff]
    %v114 = vld [vmem:[#allocation2 + $0x2d0] sm:$0xff]
    %v115 = vld [vmem:[#allocation2 + $0x2d8] sm:$0xff]
    %v116 = vld [vmem:[#allocation2 + $0x2e0] sm:$0xff]
    %v117 = vld [vmem:[#allocation2 + $0x2e8] sm:$0xff]
    %v118 = vld [vmem:[#allocation2 + $0x2f0] sm:$0xff]
    %v119 = vld [vmem:[#allocation2 + $0x2f8] sm:$0xff]
    %v120 = vand.u32 2147483647, %v24
    %v121 = vand.u32 2147483647, %v25
    %v122 = vand.u32 2147483647, %v26
    %v123 = vand.u32 2147483647, %v27
    %v124 = vand.u32 2147483647, %v28
    %v125 = vand.u32 2147483647, %v29
    %v126 = vand.u32 2147483647, %v30
    %v127 = vand.u32 2147483647, %v31
    %v128 = vand.u32 2147483647, %v32
    %v129 = vand.u32 2147483647, %v33
    %v130 = vand.u32 2147483647, %v34
    %v131 = vand.u32 2147483647, %v35
    %v132 = vand.u32 2147483647, %v36
    %v133 = vand.u32 2147483647, %v37
    %v134 = vand.u32 2147483647, %v38
    %v135 = vand.u32 2147483647, %v39
    %v136 = vand.u32 2147483647, %v40
    %v137 = vand.u32 2147483647, %v41
    %v138 = vand.u32 2147483647, %v42
    %v139 = vand.u32 2147483647, %v43
    %v140 = vand.u32 2147483647, %v44
    %v141 = vand.u32 2147483647, %v45
    %v142 = vand.u32 2147483647, %v46
    %v143 = vand.u32 2147483647, %v47
    %v144 = vand.u32 2147483647, %v48
    %v145 = vand.u32 2147483647, %v49
    %v146 = vand.u32 2147483647, %v50
    %v147 = vand.u32 2147483647, %v51
    %v148 = vand.u32 2147483647, %v52
    %v149 = vand.u32 2147483647, %v53
    %v150 = vand.u32 2147483647, %v54
    %v151 = vand.u32 2147483647, %v55
    %v152 = vand.u32 2147483647, %v56
    %v153 = vand.u32 2147483647, %v57
    %v154 = vand.u32 2147483647, %v58
    %v155 = vand.u32 2147483647, %v59
    %v156 = vand.u32 2147483647, %v60
    %v157 = vand.u32 2147483647, %v61
    %v158 = vand.u32 2147483647, %v62
    %v159 = vand.u32 2147483647, %v63
    %v160 = vand.u32 2147483647, %v64
    %v161 = vand.u32 2147483647, %v65
    %v162 = vand.u32 2147483647, %v66
    %v163 = vand.u32 2147483647, %v67
    %v164 = vand.u32 2147483647, %v68
    %v165 = vand.u32 2147483647, %v69
    %v166 = vand.u32 2147483647, %v70
    %v167 = vand.u32 2147483647, %v71
    %v168 = vand.u32 2147483647, %v72
    %v169 = vand.u32 2147483647, %v73
    %v170 = vand.u32 2147483647, %v74
    %v171 = vand.u32 2147483647, %v75
    %v172 = vand.u32 2147483647, %v76
    %v173 = vand.u32 2147483647, %v77
    %v174 = vand.u32 2147483647, %v78
    %v175 = vand.u32 2147483647, %v79
    %v176 = vand.u32 2147483647, %v80
    %v177 = vand.u32 2147483647, %v81
    %v178 = vand.u32 2147483647, %v82
    %v179 = vand.u32 2147483647, %v83
    %v180 = vand.u32 2147483647, %v84
    %v181 = vand.u32 2147483647, %v85
    %v182 = vand.u32 2147483647, %v86
    %v183 = vand.u32 2147483647, %v87
    %v184 = vand.u32 2147483647, %v88
    %v185 = vand.u32 2147483647, %v89
    %v186 = vand.u32 2147483647, %v90
    %v187 = vand.u32 2147483647, %v91
    %v188 = vand.u32 2147483647, %v92
    %v189 = vand.u32 2147483647, %v93
    %v190 = vand.u32 2147483647, %v94
    %v191 = vand.u32 2147483647, %v95
    %v192 = vand.u32 2147483647, %v96
    %v193 = vand.u32 2147483647, %v97
    %v194 = vand.u32 2147483647, %v98
    %v195 = vand.u32 2147483647, %v99
    %v196 = vand.u32 2147483647, %v100
    %v197 = vand.u32 2147483647, %v101
    %v198 = vand.u32 2147483647, %v102
    %v199 = vand.u32 2147483647, %v103
    %v200 = vand.u32 2147483647, %v104
    %v201 = vand.u32 2147483647, %v105
    %v202 = vand.u32 2147483647, %v106
    %v203 = vand.u32 2147483647, %v107
    %v204 = vand.u32 2147483647, %v108
    %v205 = vand.u32 2147483647, %v109
    %v206 = vand.u32 2147483647, %v110
    %v207 = vand.u32 2147483647, %v111
    %v208 = vand.u32 2147483647, %v112
    %v209 = vand.u32 2147483647, %v113
    %v210 = vand.u32 2147483647, %v114
    %v211 = vand.u32 2147483647, %v115
    %v212 = vand.u32 2147483647, %v116
    %v213 = vand.u32 2147483647, %v117
    %v214 = vand.u32 2147483647, %v118
    %v215 = vand.u32 2147483647, %v119
    %v216 = vmax.f32 %v120, %v124
    %v217 = vmax.f32 %v121, %v125
    %v218 = vmax.f32 %v122, %v126
    %v219 = vmax.f32 %v123, %v127
    %v220 = vmax.f32 %v216, %v128
    %v221 = vmax.f32 %v217, %v129
    %v222 = vmax.f32 %v218, %v130
    %v223 = vmax.f32 %v219, %v131
    %v224 = vmax.f32 %v220, %v132
    %v225 = vmax.f32 %v221, %v133
    %v226 = vmax.f32 %v222, %v134
    %v227 = vmax.f32 %v223, %v135
    %v228 = vmax.f32 %v224, %v136
    %v229 = vmax.f32 %v225, %v137
    %v230 = vmax.f32 %v226, %v138
    %v231 = vmax.f32 %v227, %v139
    %v232 = vmax.f32 %v228, %v140
    %v233 = vmax.f32 %v229, %v141
    %v234 = vmax.f32 %v230, %v142
    %v235 = vmax.f32 %v231, %v143
    %v236 = vmax.f32 %v232, %v144
    %v237 = vmax.f32 %v233, %v145
    %v238 = vmax.f32 %v234, %v146
    %v239 = vmax.f32 %v235, %v147
    %v240 = vmax.f32 %v236, %v148
    %v241 = vmax.f32 %v237, %v149
    %v242 = vmax.f32 %v238, %v150
    %v243 = vmax.f32 %v239, %v151
    %v244 = vmax.f32 %v240, %v152
    %v245 = vmax.f32 %v241, %v153
    %v246 = vmax.f32 %v242, %v154
    %v247 = vmax.f32 %v243, %v155
    %v248 = vmax.f32 %v244, %v156
    %v249 = vmax.f32 %v245, %v157
    %v250 = vmax.f32 %v246, %v158
    %v251 = vmax.f32 %v247, %v159
    %v252 = vmax.f32 %v248, %v160
    %v253 = vmax.f32 %v249, %v161
    %v254 = vmax.f32 %v250, %v162
    %v255 = vmax.f32 %v251, %v163
    %v256 = vmax.f32 %v252, %v164
    %v257 = vmax.f32 %v253, %v165
    %v258 = vmax.f32 %v254, %v166
    %v259 = vmax.f32 %v255, %v167
    %v260 = vmax.f32 %v256, %v168
    %v261 = vmax.f32 %v257, %v169
    %v262 = vmax.f32 %v258, %v170
    %v263 = vmax.f32 %v259, %v171
    %v264 = vmax.f32 %v260, %v172
    %v265 = vmax.f32 %v261, %v173
    %v266 = vmax.f32 %v262, %v174
    %v267 = vmax.f32 %v263, %v175
    %v268 = vmax.f32 %v264, %v176
    %v269 = vmax.f32 %v265, %v177
    %v270 = vmax.f32 %v266, %v178
    %v271 = vmax.f32 %v267, %v179
    %v272 = vmax.f32 %v268, %v180
    %v273 = vmax.f32 %v269, %v181
    %v274 = vmax.f32 %v270, %v182
    %v275 = vmax.f32 %v271, %v183
    %v276 = vmax.f32 %v272, %v184
    %v277 = vmax.f32 %v273, %v185
    %v278 = vmax.f32 %v274, %v186
    %v279 = vmax.f32 %v275, %v187
    %v280 = vmax.f32 %v276, %v188
    %v281 = vmax.f32 %v277, %v189
    %v282 = vmax.f32 %v278, %v190
    %v283 = vmax.f32 %v279, %v191
    %v284 = vmax.f32 %v280, %v192
    %v285 = vmax.f32 %v281, %v193
    %v286 = vmax.f32 %v282, %v194
    %v287 = vmax.f32 %v283, %v195
    %v288 = vmax.f32 %v284, %v196
    %v289 = vmax.f32 %v285, %v197
    %v290 = vmax.f32 %v286, %v198
    %v291 = vmax.f32 %v287, %v199
    %v292 = vmax.f32 %v288, %v200
    %v293 = vmax.f32 %v289, %v201
    %v294 = vmax.f32 %v290, %v202
    %v295 = vmax.f32 %v291, %v203
    %v296 = vmax.f32 %v292, %v204
    %v297 = vmax.f32 %v293, %v205
    %v298 = vmax.f32 %v294, %v206
    %v299 = vmax.f32 %v295, %v207
    %v300 = vmax.f32 %v296, %v208
    %v301 = vmax.f32 %v297, %v209
    %v302 = vmax.f32 %v298, %v210
    %v303 = vmax.f32 %v299, %v211
    %v304 = vmax.f32 %v300, %v212
    %v305 = vmax.f32 %v301, %v213
    %v306 = vmax.f32 %v302, %v214
    %v307 = vmax.f32 %v303, %v215
    %v308 = vmax.f32 %v304, %v305
    %v309 = vmax.f32 %v306, %v307
    %v310 = vmax.f32 %v308, %v309
    %311 = vmax.xlane.f32.xlu0 %v310
    %v312 = vpop.xlane.xlu0 %311
    %v313 = vrot.slane %v312, 4
    %v314 = vmax.f32 %v312, %v313
    %v315 = vrot.slane %v314, 2
    %v316 = vmax.f32 %v314, %v315
    %v317 = vrot.slane %v316, 1
    %v318 = vmax.f32 %v316, %v317
    %s319 = vtos %v318
    %v320 = vstv %s319
    %321 = vst [vmem:[%s1] sm:$0xff] %v320
    // Predicated region
    $region10: #{fp8_division_transpose.2} parent=1 // pred_check
      _
    $region11: #{fp8_division_transpose.2} parent=1 // pred_check_branch
      %323 = sbr.rel (0) target = $region13
    $region12: #{fp8_division_transpose.2} parent=1 // pred_region
      _
    $region13: #{fp8_division_transpose.2} parent=1 // pred_fallthru
      _
    // Predicated region
    $region14: #{fp8_division_transpose.2} parent=1 // pred_check
      _
    $region15: #{fp8_division_transpose.2} parent=1 // pred_check_branch
      %325 = sbr.rel (0) target = $region17
    $region16: #{fp8_division_transpose.2} parent=1 // pred_region
      _
    $region17: #{fp8_division_transpose.2} parent=1 // pred_fallthru
      _
    %326 = vsyncpa [#allocation3], 1

// kernel: fp8_division_transpose.3
$region0: #{fp8_division_transpose.3}
  #allocation0 [shape = 'u32[]', space=smem, size = 0x4, offset = 0x4, fixed_abs, tag = 'smem constant byte address 0x4 - core index']
  #allocation1 [shape = 'u32[72,128]{1,0:T(1,128)}', space=vmem, size = 0x9000, scoped, tag = 'internal scratch']
  #allocation2 [shape = 'f32[1,1]{1,0:T(1,128)S(6)}', space=smem, size = 0x200, scoped, tag = 'scoped memory for fp8_division_transpose.3']
  %s0 = inlined_call_operand.<no memory space> [shape: f32[1,1], index: 0, kind: input, shape index: {}]
  %s1 = inlined_call_operand.hbm [shape: f32[256,384], index: 1, kind: input, shape index: {}]
  %s2 = inlined_call_operand.hbm [shape: f8e4m3fn[256,384], index: 2, kind: output, shape index: {0}]
  %s3 = inlined_call_operand.hbm [shape: f8e4m3fn[384,256], index: 3, kind: output, shape index: {1}]
  %4 = xla_tuple %s2, %s3
  %s5 = sld [smem:[#allocation0]]
  $region30: #{fp8_division_transpose.3} parent=0
    _
  %s7 = ssub.s32 1, %s5
  %s8 = scalar_select 0, %s7, %s5
  %9 = sst [smem:[#allocation2]] %s0
  $region1: #{fp8_division_transpose.3} parent=0
    #allocation3 [shape = 'u8[393216]{0}', space=vmem, size = 0x60000, scoped, tag = 'input window, operand 1, single buffered']
    #allocation4 [shape = 's32[1]{0}', space=sflag, size = 0x4, scoped, tag = 'scoped memory for fp8_division_transpose.3']
    #allocation5 [shape = 's32[1]{0}', space=sflag, size = 0x4, scoped, tag = 'scoped memory for fp8_division_transpose.3']
    #allocation6 [shape = 'u8[98304]{0}', space=vmem, size = 0x18000, scoped, tag = 'output window, operand 0, single buffered']
    #allocation7 [shape = 'u8[98304]{0}', space=vmem, size = 0x18000, scoped, tag = 'output window, operand 1, single buffered']
    #allocation8 [shape = 's32[1]{0}', space=sflag, size = 0x4, scoped, tag = 'scoped memory for fp8_division_transpose.3']
    %10 = vsyncpa [#allocation4], 0
    %11 = vsyncpa [#allocation5], 0
    %12 = vsyncpa [#allocation8], 0
    // Predicated region
    $region2: #{fp8_division_transpose.3} parent=1 // pred_check
      _
    $region3: #{fp8_division_transpose.3} parent=1 // pred_check_branch
      %14 = sbr.rel (0) target = $region5
    $region4: #{fp8_division_transpose.3} parent=1 // pred_region
      _
    $region5: #{fp8_division_transpose.3} parent=1 // pred_fallthru
      _
    // Predicated region
    $region6: #{fp8_division_transpose.3} parent=1 // pred_check
      _
    $region7: #{fp8_division_transpose.3} parent=1 // pred_check_branch
      %16 = sbr.rel (0) target = $region9
    $region8: #{fp8_division_transpose.3} parent=1 // pred_region
      %18 = vsyncadd [#allocation4], 0
      %s19 = sshll.u32 %s1, 4
      %s20 = int_to_ptr.hbm [resolvable:$true] %s19
      %s21 = sshll.u32 [#allocation3], 4
      %s22 = int_to_ptr.vmem [resolvable:$true] %s21
      %27 = dma.hbm_to_vmem [thread:$0]  %s20, 12288, %s22, [#allocation4], 384, 384, 24
    $region9: #{fp8_division_transpose.3} parent=1 // pred_fallthru
      _
    // Predicated region
    $region10: #{fp8_division_transpose.3} parent=1 // pred_check
      _
    $region11: #{fp8_division_transpose.3} parent=1 // pred_check_branch
      %29 = sbr.rel (0) target = $region13
    $region12: #{fp8_division_transpose.3} parent=1 // pred_region
      %31 = dma.done [#allocation4], 12288
    $region13: #{fp8_division_transpose.3} parent=1 // pred_fallthru
      _
    %s32 = sld [smem:[#allocation2]]
    %p33 = scmp.gt.f32.partialorder %s32, 0.0
    %v34 = vstv %s32
    %v35 = vrcp.pop %v34
    %v36 = vmul.f32 %v34, %v35
    %v37 = vsub.f32 1.0, %v36
    %v38 = vmul.f32 %v35, %v37
    %v39 = vadd.f32 %v35, %v38
    %vm40 = vweird.f32 %v34
    %vm41 = vweird.f32 %v35
    %vm42 = vmor %vm40, %vm41
    %v43 = vsel %vm42, %v35, %v39
    %v44 = vand.u32 2147483647, %v34
    %vm45 = vcmp.eq.f32.partialorder %v44, 8.507059e+37
    %v46 = vand.u32 %v34, 2147483648
    %v47 = vor.u32 1.1754944e-38, %v46
    %v48 = vsel %vm45, %v47, %v43
    %s49 = vtos %v48
    %s50 = scalar_select %p33, %s49, 0.0
    %v51 = vld [vmem:[#allocation3] sm:$0xff]
    %v52 = vld [vmem:[#allocation3 + $0x8] sm:$0xff]
    %v53 = vld [vmem:[#allocation3 + $0x10] sm:$0xff]
    %v54 = vld [vmem:[#allocation3 + $0x18] sm:$0xff]
    %v55 = vld [vmem:[#allocation3 + $0x20] sm:$0xff]
    %v56 = vld [vmem:[#allocation3 + $0x28] sm:$0xff]
    %v57 = vld [vmem:[#allocation3 + $0x30] sm:$0xff]
    %v58 = vld [vmem:[#allocation3 + $0x38] sm:$0xff]
    %v59 = vld [vmem:[#allocation3 + $0x40] sm:$0xff]
    %v60 = vld [vmem:[#allocation3 + $0x48] sm:$0xff]
    %v61 = vld [vmem:[#allocation3 + $0x50] sm:$0xff]
    %v62 = vld [vmem:[#allocation3 + $0x58] sm:$0xff]
    %v63 = vld [vmem:[#allocation3 + $0x60] sm:$0xff]
    %v64 = vld [vmem:[#allocation3 + $0x68] sm:$0xff]
    %v65 = vld [vmem:[#allocation3 + $0x70] sm:$0xff]
    %v66 = vld [vmem:[#allocation3 + $0x78] sm:$0xff]
    %v67 = vld [vmem:[#allocation3 + $0x80] sm:$0xff]
    %v68 = vld [vmem:[#allocation3 + $0x88] sm:$0xff]
    %v69 = vld [vmem:[#allocation3 + $0x90] sm:$0xff]
    %v70 = vld [vmem:[#allocation3 + $0x98] sm:$0xff]
    %v71 = vld [vmem:[#allocation3 + $0xa0] sm:$0xff]
    %v72 = vld [vmem:[#allocation3 + $0xa8] sm:$0xff]
    %v73 = vld [vmem:[#allocation3 + $0xb0] sm:$0xff]
    %v74 = vld [vmem:[#allocation3 + $0xb8] sm:$0xff]
    %v75 = vld [vmem:[#allocation3 + $0xc0] sm:$0xff]
    %v76 = vld [vmem:[#allocation3 + $0xc8] sm:$0xff]
    %v77 = vld [vmem:[#allocation3 + $0xd0] sm:$0xff]
    %v78 = vld [vmem:[#allocation3 + $0xd8] sm:$0xff]
    %v79 = vld [vmem:[#allocation3 + $0xe0] sm:$0xff]
    %v80 = vld [vmem:[#allocation3 + $0xe8] sm:$0xff]
    %v81 = vld [vmem:[#allocation3 + $0xf0] sm:$0xff]
    %v82 = vld [vmem:[#allocation3 + $0xf8] sm:$0xff]
    %v83 = vld [vmem:[#allocation3 + $0x100] sm:$0xff]
    %v84 = vld [vmem:[#allocation3 + $0x108] sm:$0xff]
    %v85 = vld [vmem:[#allocation3 + $0x110] sm:$0xff]
    %v86 = vld [vmem:[#allocation3 + $0x118] sm:$0xff]
    %v87 = vld [vmem:[#allocation3 + $0x120] sm:$0xff]
    %v88 = vld [vmem:[#allocation3 + $0x128] sm:$0xff]
    %v89 = vld [vmem:[#allocation3 + $0x130] sm:$0xff]
    %v90 = vld [vmem:[#allocation3 + $0x138] sm:$0xff]
    %v91 = vld [vmem:[#allocation3 + $0x140] sm:$0xff]
    %v92 = vld [vmem:[#allocation3 + $0x148] sm:$0xff]
    %v93 = vld [vmem:[#allocation3 + $0x150] sm:$0xff]
    %v94 = vld [vmem:[#allocation3 + $0x158] sm:$0xff]
    %v95 = vld [vmem:[#allocation3 + $0x160] sm:$0xff]
    %v96 = vld [vmem:[#allocation3 + $0x168] sm:$0xff]
    %v97 = vld [vmem:[#allocation3 + $0x170] sm:$0xff]
    %v98 = vld [vmem:[#allocation3 + $0x178] sm:$0xff]
    %v99 = vld [vmem:[#allocation3 + $0x180] sm:$0xff]
    %v100 = vld [vmem:[#allocation3 + $0x188] sm:$0xff]
    %v101 = vld [vmem:[#allocation3 + $0x190] sm:$0xff]
    %v102 = vld [vmem:[#allocation3 + $0x198] sm:$0xff]
    %v103 = vld [vmem:[#allocation3 + $0x1a0] sm:$0xff]
    %v104 = vld [vmem:[#allocation3 + $0x1a8] sm:$0xff]
    %v105 = vld [vmem:[#allocation3 + $0x1b0] sm:$0xff]
    %v106 = vld [vmem:[#allocation3 + $0x1b8] sm:$0xff]
    %v107 = vld [vmem:[#allocation3 + $0x1c0] sm:$0xff]
    %v108 = vld [vmem:[#allocation3 + $0x1c8] sm:$0xff]
    %v109 = vld [vmem:[#allocation3 + $0x1d0] sm:$0xff]
    %v110 = vld [vmem:[#allocation3 + $0x1d8] sm:$0xff]
    %v111 = vld [vmem:[#allocation3 + $0x1e0] sm:$0xff]
    %v112 = vld [vmem:[#allocation3 + $0x1e8] sm:$0xff]
    %v113 = vld [vmem:[#allocation3 + $0x1f0] sm:$0xff]
    %v114 = vld [vmem:[#allocation3 + $0x1f8] sm:$0xff]
    %v115 = vld [vmem:[#allocation3 + $0x200] sm:$0xff]
    %v116 = vld [vmem:[#allocation3 + $0x208] sm:$0xff]
    %v117 = vld [vmem:[#allocation3 + $0x210] sm:$0xff]
    %v118 = vld [vmem:[#allocation3 + $0x218] sm:$0xff]
    %v119 = vld [vmem:[#allocation3 + $0x220] sm:$0xff]
    %v120 = vld [vmem:[#allocation3 + $0x228] sm:$0xff]
    %v121 = vld [vmem:[#allocation3 + $0x230] sm:$0xff]
    %v122 = vld [vmem:[#allocation3 + $0x238] sm:$0xff]
    %v123 = vld [vmem:[#allocation3 + $0x240] sm:$0xff]
    %v124 = vld [vmem:[#allocation3 + $0x248] sm:$0xff]
    %v125 = vld [vmem:[#allocation3 + $0x250] sm:$0xff]
    %v126 = vld [vmem:[#allocation3 + $0x258] sm:$0xff]
    %v127 = vld [vmem:[#allocation3 + $0x260] sm:$0xff]
    %v128 = vld [vmem:[#allocation3 + $0x268] sm:$0xff]
    %v129 = vld [vmem:[#allocation3 + $0x270] sm:$0xff]
    %v130 = vld [vmem:[#allocation3 + $0x278] sm:$0xff]
    %v131 = vld [vmem:[#allocation3 + $0x280] sm:$0xff]
    %v132 = vld [vmem:[#allocation3 + $0x288] sm:$0xff]
    %v133 = vld [vmem:[#allocation3 + $0x290] sm:$0xff]
    %v134 = vld [vmem:[#allocation3 + $0x298] sm:$0xff]
    %v135 = vld [vmem:[#allocation3 + $0x2a0] sm:$0xff]
    %v136 = vld [vmem:[#allocation3 + $0x2a8] sm:$0xff]
    %v137 = vld [vmem:[#allocation3 + $0x2b0] sm:$0xff]
    %v138 = vld [vmem:[#allocation3 + $0x2b8] sm:$0xff]
    %v139 = vld [vmem:[#allocation3 + $0x2c0] sm:$0xff]
    %v140 = vld [vmem:[#allocation3 + $0x2c8] sm:$0xff]
    %v141 = vld [vmem:[#allocation3 + $0x2d0] sm:$0xff]
    %v142 = vld [vmem:[#allocation3 + $0x2d8] sm:$0xff]
    %v143 = vld [vmem:[#allocation3 + $0x2e0] sm:$0xff]
    %v144 = vld [vmem:[#allocation3 + $0x2e8] sm:$0xff]
    %v145 = vld [vmem:[#allocation3 + $0x2f0] sm:$0xff]
    %v146 = vld [vmem:[#allocation3 + $0x2f8] sm:$0xff]
    %v147 = vstv %s50
    %v148 = vmul.f32 %v51, %v147
    %v149 = vmul.f32 %v52, %v147
    %v150 = vmul.f32 %v53, %v147
    %v151 = vmul.f32 %v54, %v147
    %v152 = vmul.f32 %v55, %v147
    %v153 = vmul.f32 %v56, %v147
    %v154 = vmul.f32 %v57, %v147
    %v155 = vmul.f32 %v58, %v147
    %v156 = vmul.f32 %v59, %v147
    %v157 = vmul.f32 %v60, %v147
    %v158 = vmul.f32 %v61, %v147
    %v159 = vmul.f32 %v62, %v147
    %v160 = vmul.f32 %v63, %v147
    %v161 = vmul.f32 %v64, %v147
    %v162 = vmul.f32 %v65, %v147
    %v163 = vmul.f32 %v66, %v147
    %v164 = vmul.f32 %v67, %v147
    %v165 = vmul.f32 %v68, %v147
    %v166 = vmul.f32 %v69, %v147
    %v167 = vmul.f32 %v70, %v147
    %v168 = vmul.f32 %v71, %v147
    %v169 = vmul.f32 %v72, %v147
    %v170 = vmul.f32 %v73, %v147
    %v171 = vmul.f32 %v74, %v147
    %v172 = vmul.f32 %v75, %v147
    %v173 = vmul.f32 %v76, %v147
    %v174 = vmul.f32 %v77, %v147
    %v175 = vmul.f32 %v78, %v147
    %v176 = vmul.f32 %v79, %v147
    %v177 = vmul.f32 %v80, %v147
    %v178 = vmul.f32 %v81, %v147
    %v179 = vmul.f32 %v82, %v147
    %v180 = vmul.f32 %v83, %v147
    %v181 = vmul.f32 %v84, %v147
    %v182 = vmul.f32 %v85, %v147
    %v183 = vmul.f32 %v86, %v147
    %v184 = vmul.f32 %v87, %v147
    %v185 = vmul.f32 %v88, %v147
    %v186 = vmul.f32 %v89, %v147
    %v187 = vmul.f32 %v90, %v147
    %v188 = vmul.f32 %v91, %v147
    %v189 = vmul.f32 %v92, %v147
    %v190 = vmul.f32 %v93, %v147
    %v191 = vmul.f32 %v94, %v147
    %v192 = vmul.f32 %v95, %v147
    %v193 = vmul.f32 %v96, %v147
    %v194 = vmul.f32 %v97, %v147
    %v195 = vmul.f32 %v98, %v147
    %v196 = vmul.f32 %v99, %v147
    %v197 = vmul.f32 %v100, %v147
    %v198 = vmul.f32 %v101, %v147
    %v199 = vmul.f32 %v102, %v147
    %v200 = vmul.f32 %v103, %v147
    %v201 = vmul.f32 %v104, %v147
    %v202 = vmul.f32 %v105, %v147
    %v203 = vmul.f32 %v106, %v147
    %v204 = vmul.f32 %v107, %v147
    %v205 = vmul.f32 %v108, %v147
    %v206 = vmul.f32 %v109, %v147
    %v207 = vmul.f32 %v110, %v147
    %v208 = vmul.f32 %v111, %v147
    %v209 = vmul.f32 %v112, %v147
    %v210 = vmul.f32 %v113, %v147
    %v211 = vmul.f32 %v114, %v147
    %v212 = vmul.f32 %v115, %v147
    %v213 = vmul.f32 %v116, %v147
    %v214 = vmul.f32 %v117, %v147
    %v215 = vmul.f32 %v118, %v147
    %v216 = vmul.f32 %v119, %v147
    %v217 = vmul.f32 %v120, %v147
    %v218 = vmul.f32 %v121, %v147
    %v219 = vmul.f32 %v122, %v147
    %v220 = vmul.f32 %v123, %v147
    %v221 = vmul.f32 %v124, %v147
    %v222 = vmul.f32 %v125, %v147
    %v223 = vmul.f32 %v126, %v147
    %v224 = vmul.f32 %v127, %v147
    %v225 = vmul.f32 %v128, %v147
    %v226 = vmul.f32 %v129, %v147
    %v227 = vmul.f32 %v130, %v147
    %v228 = vmul.f32 %v131, %v147
    %v229 = vmul.f32 %v132, %v147
    %v230 = vmul.f32 %v133, %v147
    %v231 = vmul.f32 %v134, %v147
    %v232 = vmul.f32 %v135, %v147
    %v233 = vmul.f32 %v136, %v147
    %v234 = vmul.f32 %v137, %v147
    %v235 = vmul.f32 %v138, %v147
    %v236 = vmul.f32 %v139, %v147
    %v237 = vmul.f32 %v140, %v147
    %v238 = vmul.f32 %v141, %v147
    %v239 = vmul.f32 %v142, %v147
    %v240 = vmul.f32 %v143, %v147
    %v241 = vmul.f32 %v144, %v147
    %v242 = vmul.f32 %v145, %v147
    %v243 = vmul.f32 %v146, %v147
    %v244 = vmax.f32 %v148, -448.0
    %v245 = vmax.f32 %v149, -448.0
    %v246 = vmax.f32 %v150, -448.0
    %v247 = vmax.f32 %v151, -448.0
    %v248 = vmax.f32 %v152, -448.0
    %v249 = vmax.f32 %v153, -448.0
    %v250 = vmax.f32 %v154, -448.0
    %v251 = vmax.f32 %v155, -448.0
    %v252 = vmax.f32 %v156, -448.0
    %v253 = vmax.f32 %v157, -448.0
    %v254 = vmax.f32 %v158, -448.0
    %v255 = vmax.f32 %v159, -448.0
    %v256 = vmax.f32 %v160, -448.0
    %v257 = vmax.f32 %v161, -448.0
    %v258 = vmax.f32 %v162, -448.0
    %v259 = vmax.f32 %v163, -448.0
    %v260 = vmax.f32 %v164, -448.0
    %v261 = vmax.f32 %v165, -448.0
    %v262 = vmax.f32 %v166, -448.0
    %v263 = vmax.f32 %v167, -448.0
    %v264 = vmax.f32 %v168, -448.0
    %v265 = vmax.f32 %v169, -448.0
    %v266 = vmax.f32 %v170, -448.0
    %v267 = vmax.f32 %v171, -448.0
    %v268 = vmax.f32 %v172, -448.0
    %v269 = vmax.f32 %v173, -448.0
    %v270 = vmax.f32 %v174, -448.0
    %v271 = vmax.f32 %v175, -448.0
    %v272 = vmax.f32 %v176, -448.0
    %v273 = vmax.f32 %v177, -448.0
    %v274 = vmax.f32 %v178, -448.0
    %v275 = vmax.f32 %v179, -448.0
    %v276 = vmax.f32 %v180, -448.0
    %v277 = vmax.f32 %v181, -448.0
    %v278 = vmax.f32 %v182, -448.0
    %v279 = vmax.f32 %v183, -448.0
    %v280 = vmax.f32 %v184, -448.0
    %v281 = vmax.f32 %v185, -448.0
    %v282 = vmax.f32 %v186, -448.0
    %v283 = vmax.f32 %v187, -448.0
    %v284 = vmax.f32 %v188, -448.0
    %v285 = vmax.f32 %v189, -448.0
    %v286 = vmax.f32 %v190, -448.0
    %v287 = vmax.f32 %v191, -448.0
    %v288 = vmax.f32 %v192, -448.0
    %v289 = vmax.f32 %v193, -448.0
    %v290 = vmax.f32 %v194, -448.0
    %v291 = vmax.f32 %v195, -448.0
    %v292 = vmax.f32 %v196, -448.0
    %v293 = vmax.f32 %v197, -448.0
    %v294 = vmax.f32 %v198, -448.0
    %v295 = vmax.f32 %v199, -448.0
    %v296 = vmax.f32 %v200, -448.0
    %v297 = vmax.f32 %v201, -448.0
    %v298 = vmax.f32 %v202, -448.0
    %v299 = vmax.f32 %v203, -448.0
    %v300 = vmax.f32 %v204, -448.0
    %v301 = vmax.f32 %v205, -448.0
    %v302 = vmax.f32 %v206, -448.0
    %v303 = vmax.f32 %v207, -448.0
    %v304 = vmax.f32 %v208, -448.0
    %v305 = vmax.f32 %v209, -448.0
    %v306 = vmax.f32 %v210, -448.0
    %v307 = vmax.f32 %v211, -448.0
    %v308 = vmax.f32 %v212, -448.0
    %v309 = vmax.f32 %v213, -448.0
    %v310 = vmax.f32 %v214, -448.0
    %v311 = vmax.f32 %v215, -448.0
    %v312 = vmax.f32 %v216, -448.0
    %v313 = vmax.f32 %v217, -448.0
    %v314 = vmax.f32 %v218, -448.0
    %v315 = vmax.f32 %v219, -448.0
    %v316 = vmax.f32 %v220, -448.0
    %v317 = vmax.f32 %v221, -448.0
    %v318 = vmax.f32 %v222, -448.0
    %v319 = vmax.f32 %v223, -448.0
    %v320 = vmax.f32 %v224, -448.0
    %v321 = vmax.f32 %v225, -448.0
    %v322 = vmax.f32 %v226, -448.0
    %v323 = vmax.f32 %v227, -448.0
    %v324 = vmax.f32 %v228, -448.0
    %v325 = vmax.f32 %v229, -448.0
    %v326 = vmax.f32 %v230, -448.0
    %v327 = vmax.f32 %v231, -448.0
    %v328 = vmax.f32 %v232, -448.0
    %v329 = vmax.f32 %v233, -448.0
    %v330 = vmax.f32 %v234, -448.0
    %v331 = vmax.f32 %v235, -448.0
    %v332 = vmax.f32 %v236, -448.0
    %v333 = vmax.f32 %v237, -448.0
    %v334 = vmax.f32 %v238, -448.0
    %v335 = vmax.f32 %v239, -448.0
    %v336 = vmax.f32 %v240, -448.0
    %v337 = vmax.f32 %v241, -448.0
    %v338 = vmax.f32 %v242, -448.0
    %v339 = vmax.f32 %v243, -448.0
    %v340 = vmin.f32 %v244, 448.0
    %v341 = vmin.f32 %v245, 448.0
    %v342 = vmin.f32 %v246, 448.0
    %v343 = vmin.f32 %v247, 448.0
    %v344 = vmin.f32 %v248, 448.0
    %v345 = vmin.f32 %v249, 448.0
    %v346 = vmin.f32 %v250, 448.0
    %v347 = vmin.f32 %v251, 448.0
    %v348 = vmin.f32 %v252, 448.0
    %v349 = vmin.f32 %v253, 448.0
    %v350 = vmin.f32 %v254, 448.0
    %v351 = vmin.f32 %v255, 448.0
    %v352 = vmin.f32 %v256, 448.0
    %v353 = vmin.f32 %v257, 448.0
    %v354 = vmin.f32 %v258, 448.0
    %v355 = vmin.f32 %v259, 448.0
    %v356 = vmin.f32 %v260, 448.0
    %v357 = vmin.f32 %v261, 448.0
    %v358 = vmin.f32 %v262, 448.0
    %v359 = vmin.f32 %v263, 448.0
    %v360 = vmin.f32 %v264, 448.0
    %v361 = vmin.f32 %v265, 448.0
    %v362 = vmin.f32 %v266, 448.0
    %v363 = vmin.f32 %v267, 448.0
    %v364 = vmin.f32 %v268, 448.0
    %v365 = vmin.f32 %v269, 448.0
    %v366 = vmin.f32 %v270, 448.0
    %v367 = vmin.f32 %v271, 448.0
    %v368 = vmin.f32 %v272, 448.0
    %v369 = vmin.f32 %v273, 448.0
    %v370 = vmin.f32 %v274, 448.0
    %v371 = vmin.f32 %v275, 448.0
    %v372 = vmin.f32 %v276, 448.0
    %v373 = vmin.f32 %v277, 448.0
    %v374 = vmin.f32 %v278, 448.0
    %v375 = vmin.f32 %v279, 448.0
    %v376 = vmin.f32 %v280, 448.0
    %v377 = vmin.f32 %v281, 448.0
    %v378 = vmin.f32 %v282, 448.0
    %v379 = vmin.f32 %v283, 448.0
    %v380 = vmin.f32 %v284, 448.0
    %v381 = vmin.f32 %v285, 448.0
    %v382 = vmin.f32 %v286, 448.0
    %v383 = vmin.f32 %v287, 448.0
    %v384 = vmin.f32 %v288, 448.0
    %v385 = vmin.f32 %v289, 448.0
    %v386 = vmin.f32 %v290, 448.0
    %v387 = vmin.f32 %v291, 448.0
    %v388 = vmin.f32 %v292, 448.0
    %v389 = vmin.f32 %v293, 448.0
    %v390 = vmin.f32 %v294, 448.0
    %v391 = vmin.f32 %v295, 448.0
    %v392 = vmin.f32 %v296, 448.0
    %v393 = vmin.f32 %v297, 448.0
    %v394 = vmin.f32 %v298, 448.0
    %v395 = vmin.f32 %v299, 448.0
    %v396 = vmin.f32 %v300, 448.0
    %v397 = vmin.f32 %v301, 448.0
    %v398 = vmin.f32 %v302, 448.0
    %v399 = vmin.f32 %v303, 448.0
    %v400 = vmin.f32 %v304, 448.0
    %v401 = vmin.f32 %v305, 448.0
    %v402 = vmin.f32 %v306, 448.0
    %v403 = vmin.f32 %v307, 448.0
    %v404 = vmin.f32 %v308, 448.0
    %v405 = vmin.f32 %v309, 448.0
    %v406 = vmin.f32 %v310, 448.0
    %v407 = vmin.f32 %v311, 448.0
    %v408 = vmin.f32 %v312, 448.0
    %v409 = vmin.f32 %v313, 448.0
    %v410 = vmin.f32 %v314, 448.0
    %v411 = vmin.f32 %v315, 448.0
    %v412 = vmin.f32 %v316, 448.0
    %v413 = vmin.f32 %v317, 448.0
    %v414 = vmin.f32 %v318, 448.0
    %v415 = vmin.f32 %v319, 448.0
    %v416 = vmin.f32 %v320, 448.0
    %v417 = vmin.f32 %v321, 448.0
    %v418 = vmin.f32 %v322, 448.0
    %v419 = vmin.f32 %v323, 448.0
    %v420 = vmin.f32 %v324, 448.0
    %v421 = vmin.f32 %v325, 448.0
    %v422 = vmin.f32 %v326, 448.0
    %v423 = vmin.f32 %v327, 448.0
    %v424 = vmin.f32 %v328, 448.0
    %v425 = vmin.f32 %v329, 448.0
    %v426 = vmin.f32 %v330, 448.0
    %v427 = vmin.f32 %v331, 448.0
    %v428 = vmin.f32 %v332, 448.0
    %v429 = vmin.f32 %v333, 448.0
    %v430 = vmin.f32 %v334, 448.0
    %v431 = vmin.f32 %v335, 448.0
    %v432 = vmin.f32 %v336, 448.0
    %v433 = vmin.f32 %v337, 448.0
    %v434 = vmin.f32 %v338, 448.0
    %v435 = vmin.f32 %v339, 448.0
    %v436 = vand.u32 2147483647, %v340
    %v437 = vmul.f32 %v340, 0.0625
    %v438 = vcvt.f32.f8e4m3b11 %v437
    %vm439 = vweird.f32 %v340
    %v440 = vsel %vm439, 127, %v438
    %v441 = vshrl.u32 %v340, 24
    %v442 = vand.u32 %v441, 128
    %vm443 = vcmp.le.f32.partialorder %v436, 0.0009765625
    %v444 = vsel %vm443, %v442, %v440
    %v445 = vand.u32 2147483647, %v343
    %v446 = vmul.f32 %v343, 0.0625
    %v447 = vcvt.f32.f8e4m3b11 %v446
    %vm448 = vweird.f32 %v343
    %v449 = vsel %vm448, 127, %v447
    %v450 = vshrl.u32 %v343, 24
    %v451 = vand.u32 %v450, 128
    %vm452 = vcmp.le.f32.partialorder %v445, 0.0009765625
    %v453 = vsel %vm452, %v451, %v449
    %v454 = vand.u32 2147483647, %v346
    %v455 = vmul.f32 %v346, 0.0625
    %v456 = vcvt.f32.f8e4m3b11 %v455
    %vm457 = vweird.f32 %v346
    %v458 = vsel %vm457, 127, %v456
    %v459 = vshrl.u32 %v346, 24
    %v460 = vand.u32 %v459, 128
    %vm461 = vcmp.le.f32.partialorder %v454, 0.0009765625
    %v462 = vsel %vm461, %v460, %v458
    %v463 = vand.u32 2147483647, %v349
    %v464 = vmul.f32 %v349, 0.0625
    %v465 = vcvt.f32.f8e4m3b11 %v464
    %vm466 = vweird.f32 %v349
    %v467 = vsel %vm466, 127, %v465
    %v468 = vshrl.u32 %v349, 24
    %v469 = vand.u32 %v468, 128
    %vm470 = vcmp.le.f32.partialorder %v463, 0.0009765625
    %v471 = vsel %vm470, %v469, %v467
    %v472 = vpack.c.b16 %v453, %v444
    %v473 = vpack.c.b16 %v471, %v462
    %v474 = vpack.c.b8 %v473, %v472
    %v476 = vand.u32 2147483647, %v341
    %v477 = vmul.f32 %v341, 0.0625
    %v478 = vcvt.f32.f8e4m3b11 %v477
    %vm479 = vweird.f32 %v341
    %v480 = vsel %vm479, 127, %v478
    %v481 = vshrl.u32 %v341, 24
    %v482 = vand.u32 %v481, 128
    %vm483 = vcmp.le.f32.partialorder %v476, 0.0009765625
    %v484 = vsel %vm483, %v482, %v480
    %v485 = vand.u32 2147483647, %v344
    %v486 = vmul.f32 %v344, 0.0625
    %v487 = vcvt.f32.f8e4m3b11 %v486
    %vm488 = vweird.f32 %v344
    %v489 = vsel %vm488, 127, %v487
    %v490 = vshrl.u32 %v344, 24
    %v491 = vand.u32 %v490, 128
    %vm492 = vcmp.le.f32.partialorder %v485, 0.0009765625
    %v493 = vsel %vm492, %v491, %v489
    %v494 = vand.u32 2147483647, %v347
    %v495 = vmul.f32 %v347, 0.0625
    %v496 = vcvt.f32.f8e4m3b11 %v495
    %vm497 = vweird.f32 %v347
    %v498 = vsel %vm497, 127, %v496
    %v499 = vshrl.u32 %v347, 24
    %v500 = vand.u32 %v499, 128
    %vm501 = vcmp.le.f32.partialorder %v494, 0.0009765625
    %v502 = vsel %vm501, %v500, %v498
    %v503 = vand.u32 2147483647, %v350
    %v504 = vmul.f32 %v350, 0.0625
    %v505 = vcvt.f32.f8e4m3b11 %v504
    %vm506 = vweird.f32 %v350
    %v507 = vsel %vm506, 127, %v505
    %v508 = vshrl.u32 %v350, 24
    %v509 = vand.u32 %v508, 128
    %vm510 = vcmp.le.f32.partialorder %v503, 0.0009765625
    %v511 = vsel %vm510, %v509, %v507
    %v512 = vpack.c.b16 %v493, %v484
    %v513 = vpack.c.b16 %v511, %v502
    %v514 = vpack.c.b8 %v513, %v512
    %v516 = vand.u32 2147483647, %v342
    %v517 = vmul.f32 %v342, 0.0625
    %v518 = vcvt.f32.f8e4m3b11 %v517
    %vm519 = vweird.f32 %v342
    %v520 = vsel %vm519, 127, %v518
    %v521 = vshrl.u32 %v342, 24
    %v522 = vand.u32 %v521, 128
    %vm523 = vcmp.le.f32.partialorder %v516, 0.0009765625
    %v524 = vsel %vm523, %v522, %v520
    %v525 = vand.u32 2147483647, %v345
    %v526 = vmul.f32 %v345, 0.0625
    %v527 = vcvt.f32.f8e4m3b11 %v526
    %vm528 = vweird.f32 %v345
    %v529 = vsel %vm528, 127, %v527
    %v530 = vshrl.u32 %v345, 24
    %v531 = vand.u32 %v530, 128
    %vm532 = vcmp.le.f32.partialorder %v525, 0.0009765625
    %v533 = vsel %vm532, %v531, %v529
    %v534 = vand.u32 2147483647, %v348
    %v535 = vmul.f32 %v348, 0.0625
    %v536 = vcvt.f32.f8e4m3b11 %v535
    %vm537 = vweird.f32 %v348
    %v538 = vsel %vm537, 127, %v536
    %v539 = vshrl.u32 %v348, 24
    %v540 = vand.u32 %v539, 128
    %vm541 = vcmp.le.f32.partialorder %v534, 0.0009765625
    %v542 = vsel %vm541, %v540, %v538
    %v543 = vand.u32 2147483647, %v351
    %v544 = vmul.f32 %v351, 0.0625
    %v545 = vcvt.f32.f8e4m3b11 %v544
    %vm546 = vweird.f32 %v351
    %v547 = vsel %vm546, 127, %v545
    %v548 = vshrl.u32 %v351, 24
    %v549 = vand.u32 %v548, 128
    %vm550 = vcmp.le.f32.partialorder %v543, 0.0009765625
    %v551 = vsel %vm550, %v549, %v547
    %v552 = vpack.c.b16 %v533, %v524
    %v553 = vpack.c.b16 %v551, %v542
    %v554 = vpack.c.b8 %v553, %v552
    %v556 = vand.u32 2147483647, %v352
    %v557 = vmul.f32 %v352, 0.0625
    %v558 = vcvt.f32.f8e4m3b11 %v557
    %vm559 = vweird.f32 %v352
    %v560 = vsel %vm559, 127, %v558
    %v561 = vshrl.u32 %v352, 24
    %v562 = vand.u32 %v561, 128
    %vm563 = vcmp.le.f32.partialorder %v556, 0.0009765625
    %v564 = vsel %vm563, %v562, %v560
    %v565 = vand.u32 2147483647, %v355
    %v566 = vmul.f32 %v355, 0.0625
    %v567 = vcvt.f32.f8e4m3b11 %v566
    %vm568 = vweird.f32 %v355
    %v569 = vsel %vm568, 127, %v567
    %v570 = vshrl.u32 %v355, 24
    %v571 = vand.u32 %v570, 128
    %vm572 = vcmp.le.f32.partialorder %v565, 0.0009765625
    %v573 = vsel %vm572, %v571, %v569
    %v574 = vand.u32 2147483647, %v358
    %v575 = vmul.f32 %v358, 0.0625
    %v576 = vcvt.f32.f8e4m3b11 %v575
    %vm577 = vweird.f32 %v358
    %v578 = vsel %vm577, 127, %v576
    %v579 = vshrl.u32 %v358, 24
    %v580 = vand.u32 %v579, 128
    %vm581 = vcmp.le.f32.partialorder %v574, 0.0009765625
    %v582 = vsel %vm581, %v580, %v578
    %v583 = vand.u32 2147483647, %v361
    %v584 = vmul.f32 %v361, 0.0625
    %v585 = vcvt.f32.f8e4m3b11 %v584
    %vm586 = vweird.f32 %v361
    %v587 = vsel %vm586, 127, %v585
    %v588 = vshrl.u32 %v361, 24
    %v589 = vand.u32 %v588, 128
    %vm590 = vcmp.le.f32.partialorder %v583, 0.0009765625
    %v591 = vsel %vm590, %v589, %v587
    %v592 = vpack.c.b16 %v573, %v564
    %v593 = vpack.c.b16 %v591, %v582
    %v594 = vpack.c.b8 %v593, %v592
    %v596 = vand.u32 2147483647, %v353
    %v597 = vmul.f32 %v353, 0.0625
    %v598 = vcvt.f32.f8e4m3b11 %v597
    %vm599 = vweird.f32 %v353
    %v600 = vsel %vm599, 127, %v598
    %v601 = vshrl.u32 %v353, 24
    %v602 = vand.u32 %v601, 128
    %vm603 = vcmp.le.f32.partialorder %v596, 0.0009765625
    %v604 = vsel %vm603, %v602, %v600
    %v605 = vand.u32 2147483647, %v356
    %v606 = vmul.f32 %v356, 0.0625
    %v607 = vcvt.f32.f8e4m3b11 %v606
    %vm608 = vweird.f32 %v356
    %v609 = vsel %vm608, 127, %v607
    %v610 = vshrl.u32 %v356, 24
    %v611 = vand.u32 %v610, 128
    %vm612 = vcmp.le.f32.partialorder %v605, 0.0009765625
    %v613 = vsel %vm612, %v611, %v609
    %v614 = vand.u32 2147483647, %v359
    %v615 = vmul.f32 %v359, 0.0625
    %v616 = vcvt.f32.f8e4m3b11 %v615
    %vm617 = vweird.f32 %v359
    %v618 = vsel %vm617, 127, %v616
    %v619 = vshrl.u32 %v359, 24
    %v620 = vand.u32 %v619, 128
    %vm621 = vcmp.le.f32.partialorder %v614, 0.0009765625
    %v622 = vsel %vm621, %v620, %v618
    %v623 = vand.u32 2147483647, %v362
    %v624 = vmul.f32 %v362, 0.0625
    %v625 = vcvt.f32.f8e4m3b11 %v624
    %vm626 = vweird.f32 %v362
    %v627 = vsel %vm626, 127, %v625
    %v628 = vshrl.u32 %v362, 24
    %v629 = vand.u32 %v628, 128
    %vm630 = vcmp.le.f32.partialorder %v623, 0.0009765625
    %v631 = vsel %vm630, %v629, %v627
    %v632 = vpack.c.b16 %v613, %v604
    %v633 = vpack.c.b16 %v631, %v622
    %v634 = vpack.c.b8 %v633, %v632
    %v636 = vand.u32 2147483647, %v354
    %v637 = vmul.f32 %v354, 0.0625
    %v638 = vcvt.f32.f8e4m3b11 %v637
    %vm639 = vweird.f32 %v354
    %v640 = vsel %vm639, 127, %v638
    %v641 = vshrl.u32 %v354, 24
    %v642 = vand.u32 %v641, 128
    %vm643 = vcmp.le.f32.partialorder %v636, 0.0009765625
    %v644 = vsel %vm643, %v642, %v640
    %v645 = vand.u32 2147483647, %v357
    %v646 = vmul.f32 %v357, 0.0625
    %v647 = vcvt.f32.f8e4m3b11 %v646
    %vm648 = vweird.f32 %v357
    %v649 = vsel %vm648, 127, %v647
    %v650 = vshrl.u32 %v357, 24
    %v651 = vand.u32 %v650, 128
    %vm652 = vcmp.le.f32.partialorder %v645, 0.0009765625
    %v653 = vsel %vm652, %v651, %v649
    %v654 = vand.u32 2147483647, %v360
    %v655 = vmul.f32 %v360, 0.0625
    %v656 = vcvt.f32.f8e4m3b11 %v655
    %vm657 = vweird.f32 %v360
    %v658 = vsel %vm657, 127, %v656
    %v659 = vshrl.u32 %v360, 24
    %v660 = vand.u32 %v659, 128
    %vm661 = vcmp.le.f32.partialorder %v654, 0.0009765625
    %v662 = vsel %vm661, %v660, %v658
    %v663 = vand.u32 2147483647, %v363
    %v664 = vmul.f32 %v363, 0.0625
    %v665 = vcvt.f32.f8e4m3b11 %v664
    %vm666 = vweird.f32 %v363
    %v667 = vsel %vm666, 127, %v665
    %v668 = vshrl.u32 %v363, 24
    %v669 = vand.u32 %v668, 128
    %vm670 = vcmp.le.f32.partialorder %v663, 0.0009765625
    %v671 = vsel %vm670, %v669, %v667
    %v672 = vpack.c.b16 %v653, %v644
    %v673 = vpack.c.b16 %v671, %v662
    %v674 = vpack.c.b8 %v673, %v672
    %v676 = vand.u32 2147483647, %v364
    %v677 = vmul.f32 %v364, 0.0625
    %v678 = vcvt.f32.f8e4m3b11 %v677
    %vm679 = vweird.f32 %v364
    %v680 = vsel %vm679, 127, %v678
    %v681 = vshrl.u32 %v364, 24
    %v682 = vand.u32 %v681, 128
    %vm683 = vcmp.le.f32.partialorder %v676, 0.0009765625
    %v684 = vsel %vm683, %v682, %v680
    %v685 = vand.u32 2147483647, %v367
    %v686 = vmul.f32 %v367, 0.0625
    %v687 = vcvt.f32.f8e4m3b11 %v686
    %vm688 = vweird.f32 %v367
    %v689 = vsel %vm688, 127, %v687
    %v690 = vshrl.u32 %v367, 24
    %v691 = vand.u32 %v690, 128
    %vm692 = vcmp.le.f32.partialorder %v685, 0.0009765625
    %v693 = vsel %vm692, %v691, %v689
    %v694 = vand.u32 2147483647, %v370
    %v695 = vmul.f32 %v370, 0.0625
    %v696 = vcvt.f32.f8e4m3b11 %v695
    %vm697 = vweird.f32 %v370
    %v698 = vsel %vm697, 127, %v696
    %v699 = vshrl.u32 %v370, 24
    %v700 = vand.u32 %v699, 128
    %vm701 = vcmp.le.f32.partialorder %v694, 0.0009765625
    %v702 = vsel %vm701, %v700, %v698
    %v703 = vand.u32 2147483647, %v373
    %v704 = vmul.f32 %v373, 0.0625
    %v705 = vcvt.f32.f8e4m3b11 %v704
    %vm706 = vweird.f32 %v373
    %v707 = vsel %vm706, 127, %v705
    %v708 = vshrl.u32 %v373, 24
    %v709 = vand.u32 %v708, 128
    %vm710 = vcmp.le.f32.partialorder %v703, 0.0009765625
    %v711 = vsel %vm710, %v709, %v707
    %v712 = vpack.c.b16 %v693, %v684
    %v713 = vpack.c.b16 %v711, %v702
    %v714 = vpack.c.b8 %v713, %v712
    %v716 = vand.u32 2147483647, %v365
    %v717 = vmul.f32 %v365, 0.0625
    %v718 = vcvt.f32.f8e4m3b11 %v717
    %vm719 = vweird.f32 %v365
    %v720 = vsel %vm719, 127, %v718
    %v721 = vshrl.u32 %v365, 24
    %v722 = vand.u32 %v721, 128
    %vm723 = vcmp.le.f32.partialorder %v716, 0.0009765625
    %v724 = vsel %vm723, %v722, %v720
    %v725 = vand.u32 2147483647, %v368
    %v726 = vmul.f32 %v368, 0.0625
    %v727 = vcvt.f32.f8e4m3b11 %v726
    %vm728 = vweird.f32 %v368
    %v729 = vsel %vm728, 127, %v727
    %v730 = vshrl.u32 %v368, 24
    %v731 = vand.u32 %v730, 128
    %vm732 = vcmp.le.f32.partialorder %v725, 0.0009765625
    %v733 = vsel %vm732, %v731, %v729
    %v734 = vand.u32 2147483647, %v371
    %v735 = vmul.f32 %v371, 0.0625
    %v736 = vcvt.f32.f8e4m3b11 %v735
    %vm737 = vweird.f32 %v371
    %v738 = vsel %vm737, 127, %v736
    %v739 = vshrl.u32 %v371, 24
    %v740 = vand.u32 %v739, 128
    %vm741 = vcmp.le.f32.partialorder %v734, 0.0009765625
    %v742 = vsel %vm741, %v740, %v738
    %v743 = vand.u32 2147483647, %v374
    %v744 = vmul.f32 %v374, 0.0625
    %v745 = vcvt.f32.f8e4m3b11 %v744
    %vm746 = vweird.f32 %v374
    %v747 = vsel %vm746, 127, %v745
    %v748 = vshrl.u32 %v374, 24
    %v749 = vand.u32 %v748, 128
    %vm750 = vcmp.le.f32.partialorder %v743, 0.0009765625
    %v751 = vsel %vm750, %v749, %v747
    %v752 = vpack.c.b16 %v733, %v724
    %v753 = vpack.c.b16 %v751, %v742
    %v754 = vpack.c.b8 %v753, %v752
    %v756 = vand.u32 2147483647, %v366
    %v757 = vmul.f32 %v366, 0.0625
    %v758 = vcvt.f32.f8e4m3b11 %v757
    %vm759 = vweird.f32 %v366
    %v760 = vsel %vm759, 127, %v758
    %v761 = vshrl.u32 %v366, 24
    %v762 = vand.u32 %v761, 128
    %vm763 = vcmp.le.f32.partialorder %v756, 0.0009765625
    %v764 = vsel %vm763, %v762, %v760
    %v765 = vand.u32 2147483647, %v369
    %v766 = vmul.f32 %v369, 0.0625
    %v767 = vcvt.f32.f8e4m3b11 %v766
    %vm768 = vweird.f32 %v369
    %v769 = vsel %vm768, 127, %v767
    %v770 = vshrl.u32 %v369, 24
    %v771 = vand.u32 %v770, 128
    %vm772 = vcmp.le.f32.partialorder %v765, 0.0009765625
    %v773 = vsel %vm772, %v771, %v769
    %v774 = vand.u32 2147483647, %v372
    %v775 = vmul.f32 %v372, 0.0625
    %v776 = vcvt.f32.f8e4m3b11 %v775
    %vm777 = vweird.f32 %v372
    %v778 = vsel %vm777, 127, %v776
    %v779 = vshrl.u32 %v372, 24
    %v780 = vand.u32 %v779, 128
    %vm781 = vcmp.le.f32.partialorder %v774, 0.0009765625
    %v782 = vsel %vm781, %v780, %v778
    %v783 = vand.u32 2147483647, %v375
    %v784 = vmul.f32 %v375, 0.0625
    %v785 = vcvt.f32.f8e4m3b11 %v784
    %vm786 = vweird.f32 %v375
    %v787 = vsel %vm786, 127, %v785
    %v788 = vshrl.u32 %v375, 24
    %v789 = vand.u32 %v788, 128
    %vm790 = vcmp.le.f32.partialorder %v783, 0.0009765625
    %v791 = vsel %vm790, %v789, %v787
    %v792 = vpack.c.b16 %v773, %v764
    %v793 = vpack.c.b16 %v791, %v782
    %v794 = vpack.c.b8 %v793, %v792
    %v796 = vand.u32 2147483647, %v376
    %v797 = vmul.f32 %v376, 0.0625
    %v798 = vcvt.f32.f8e4m3b11 %v797
    %vm799 = vweird.f32 %v376
    %v800 = vsel %vm799, 127, %v798
    %v801 = vshrl.u32 %v376, 24
    %v802 = vand.u32 %v801, 128
    %vm803 = vcmp.le.f32.partialorder %v796, 0.0009765625
    %v804 = vsel %vm803, %v802, %v800
    %v805 = vand.u32 2147483647, %v379
    %v806 = vmul.f32 %v379, 0.0625
    %v807 = vcvt.f32.f8e4m3b11 %v806
    %vm808 = vweird.f32 %v379
    %v809 = vsel %vm808, 127, %v807
    %v810 = vshrl.u32 %v379, 24
    %v811 = vand.u32 %v810, 128
    %vm812 = vcmp.le.f32.partialorder %v805, 0.0009765625
    %v813 = vsel %vm812, %v811, %v809
    %v814 = vand.u32 2147483647, %v382
    %v815 = vmul.f32 %v382, 0.0625
    %v816 = vcvt.f32.f8e4m3b11 %v815
    %vm817 = vweird.f32 %v382
    %v818 = vsel %vm817, 127, %v816
    %v819 = vshrl.u32 %v382, 24
    %v820 = vand.u32 %v819, 128
    %vm821 = vcmp.le.f32.partialorder %v814, 0.0009765625
    %v822 = vsel %vm821, %v820, %v818
    %v823 = vand.u32 2147483647, %v385
    %v824 = vmul.f32 %v385, 0.0625
    %v825 = vcvt.f32.f8e4m3b11 %v824
    %vm826 = vweird.f32 %v385
    %v827 = vsel %vm826, 127, %v825
    %v828 = vshrl.u32 %v385, 24
    %v829 = vand.u32 %v828, 128
    %vm830 = vcmp.le.f32.partialorder %v823, 0.0009765625
    %v831 = vsel %vm830, %v829, %v827
    %v832 = vpack.c.b16 %v813, %v804
    %v833 = vpack.c.b16 %v831, %v822
    %v834 = vpack.c.b8 %v833, %v832
    %v836 = vand.u32 2147483647, %v377
    %v837 = vmul.f32 %v377, 0.0625
    %v838 = vcvt.f32.f8e4m3b11 %v837
    %vm839 = vweird.f32 %v377
    %v840 = vsel %vm839, 127, %v838
    %v841 = vshrl.u32 %v377, 24
    %v842 = vand.u32 %v841, 128
    %vm843 = vcmp.le.f32.partialorder %v836, 0.0009765625
    %v844 = vsel %vm843, %v842, %v840
    %v845 = vand.u32 2147483647, %v380
    %v846 = vmul.f32 %v380, 0.0625
    %v847 = vcvt.f32.f8e4m3b11 %v846
    %vm848 = vweird.f32 %v380
    %v849 = vsel %vm848, 127, %v847
    %v850 = vshrl.u32 %v380, 24
    %v851 = vand.u32 %v850, 128
    %vm852 = vcmp.le.f32.partialorder %v845, 0.0009765625
    %v853 = vsel %vm852, %v851, %v849
    %v854 = vand.u32 2147483647, %v383
    %v855 = vmul.f32 %v383, 0.0625
    %v856 = vcvt.f32.f8e4m3b11 %v855
    %vm857 = vweird.f32 %v383
    %v858 = vsel %vm857, 127, %v856
    %v859 = vshrl.u32 %v383, 24
    %v860 = vand.u32 %v859, 128
    %vm861 = vcmp.le.f32.partialorder %v854, 0.0009765625
    %v862 = vsel %vm861, %v860, %v858
    %v863 = vand.u32 2147483647, %v386
    %v864 = vmul.f32 %v386, 0.0625
    %v865 = vcvt.f32.f8e4m3b11 %v864
    %vm866 = vweird.f32 %v386
    %v867 = vsel %vm866, 127, %v865
    %v868 = vshrl.u32 %v386, 24
    %v869 = vand.u32 %v868, 128
    %vm870 = vcmp.le.f32.partialorder %v863, 0.0009765625
    %v871 = vsel %vm870, %v869, %v867
    %v872 = vpack.c.b16 %v853, %v844
    %v873 = vpack.c.b16 %v871, %v862
    %v874 = vpack.c.b8 %v873, %v872
    %v876 = vand.u32 2147483647, %v378
    %v877 = vmul.f32 %v378, 0.0625
    %v878 = vcvt.f32.f8e4m3b11 %v877
    %vm879 = vweird.f32 %v378
    %v880 = vsel %vm879, 127, %v878
    %v881 = vshrl.u32 %v378, 24
    %v882 = vand.u32 %v881, 128
    %vm883 = vcmp.le.f32.partialorder %v876, 0.0009765625
    %v884 = vsel %vm883, %v882, %v880
    %v885 = vand.u32 2147483647, %v381
    %v886 = vmul.f32 %v381, 0.0625
    %v887 = vcvt.f32.f8e4m3b11 %v886
    %vm888 = vweird.f32 %v381
    %v889 = vsel %vm888, 127, %v887
    %v890 = vshrl.u32 %v381, 24
    %v891 = vand.u32 %v890, 128
    %vm892 = vcmp.le.f32.partialorder %v885, 0.0009765625
    %v893 = vsel %vm892, %v891, %v889
    %v894 = vand.u32 2147483647, %v384
    %v895 = vmul.f32 %v384, 0.0625
    %v896 = vcvt.f32.f8e4m3b11 %v895
    %vm897 = vweird.f32 %v384
    %v898 = vsel %vm897, 127, %v896
    %v899 = vshrl.u32 %v384, 24
    %v900 = vand.u32 %v899, 128
    %vm901 = vcmp.le.f32.partialorder %v894, 0.0009765625
    %v902 = vsel %vm901, %v900, %v898
    %v903 = vand.u32 2147483647, %v387
    %v904 = vmul.f32 %v387, 0.0625
    %v905 = vcvt.f32.f8e4m3b11 %v904
    %vm906 = vweird.f32 %v387
    %v907 = vsel %vm906, 127, %v905
    %v908 = vshrl.u32 %v387, 24
    %v909 = vand.u32 %v908, 128
    %vm910 = vcmp.le.f32.partialorder %v903, 0.0009765625
    %v911 = vsel %vm910, %v909, %v907
    %v912 = vpack.c.b16 %v893, %v884
    %v913 = vpack.c.b16 %v911, %v902
    %v914 = vpack.c.b8 %v913, %v912
    %v916 = vand.u32 2147483647, %v388
    %v917 = vmul.f32 %v388, 0.0625
    %v918 = vcvt.f32.f8e4m3b11 %v917
    %vm919 = vweird.f32 %v388
    %v920 = vsel %vm919, 127, %v918
    %v921 = vshrl.u32 %v388, 24
    %v922 = vand.u32 %v921, 128
    %vm923 = vcmp.le.f32.partialorder %v916, 0.0009765625
    %v924 = vsel %vm923, %v922, %v920
    %v925 = vand.u32 2147483647, %v391
    %v926 = vmul.f32 %v391, 0.0625
    %v927 = vcvt.f32.f8e4m3b11 %v926
    %vm928 = vweird.f32 %v391
    %v929 = vsel %vm928, 127, %v927
    %v930 = vshrl.u32 %v391, 24
    %v931 = vand.u32 %v930, 128
    %vm932 = vcmp.le.f32.partialorder %v925, 0.0009765625
    %v933 = vsel %vm932, %v931, %v929
    %v934 = vand.u32 2147483647, %v394
    %v935 = vmul.f32 %v394, 0.0625
    %v936 = vcvt.f32.f8e4m3b11 %v935
    %vm937 = vweird.f32 %v394
    %v938 = vsel %vm937, 127, %v936
    %v939 = vshrl.u32 %v394, 24
    %v940 = vand.u32 %v939, 128
    %vm941 = vcmp.le.f32.partialorder %v934, 0.0009765625
    %v942 = vsel %vm941, %v940, %v938
    %v943 = vand.u32 2147483647, %v397
    %v944 = vmul.f32 %v397, 0.0625
    %v945 = vcvt.f32.f8e4m3b11 %v944
    %vm946 = vweird.f32 %v397
    %v947 = vsel %vm946, 127, %v945
    %v948 = vshrl.u32 %v397, 24
    %v949 = vand.u32 %v948, 128
    %vm950 = vcmp.le.f32.partialorder %v943, 0.0009765625
    %v951 = vsel %vm950, %v949, %v947
    %v952 = vpack.c.b16 %v933, %v924
    %v953 = vpack.c.b16 %v951, %v942
    %v954 = vpack.c.b8 %v953, %v952
    %v956 = vand.u32 2147483647, %v389
    %v957 = vmul.f32 %v389, 0.0625
    %v958 = vcvt.f32.f8e4m3b11 %v957
    %vm959 = vweird.f32 %v389
    %v960 = vsel %vm959, 127, %v958
    %v961 = vshrl.u32 %v389, 24
    %v962 = vand.u32 %v961, 128
    %vm963 = vcmp.le.f32.partialorder %v956, 0.0009765625
    %v964 = vsel %vm963, %v962, %v960
    %v965 = vand.u32 2147483647, %v392
    %v966 = vmul.f32 %v392, 0.0625
    %v967 = vcvt.f32.f8e4m3b11 %v966
    %vm968 = vweird.f32 %v392
    %v969 = vsel %vm968, 127, %v967
    %v970 = vshrl.u32 %v392, 24
    %v971 = vand.u32 %v970, 128
    %vm972 = vcmp.le.f32.partialorder %v965, 0.0009765625
    %v973 = vsel %vm972, %v971, %v969
    %v974 = vand.u32 2147483647, %v395
    %v975 = vmul.f32 %v395, 0.0625
    %v976 = vcvt.f32.f8e4m3b11 %v975
    %vm977 = vweird.f32 %v395
    %v978 = vsel %vm977, 127, %v976
    %v979 = vshrl.u32 %v395, 24
    %v980 = vand.u32 %v979, 128
    %vm981 = vcmp.le.f32.partialorder %v974, 0.0009765625
    %v982 = vsel %vm981, %v980, %v978
    %v983 = vand.u32 2147483647, %v398
    %v984 = vmul.f32 %v398, 0.0625
    %v985 = vcvt.f32.f8e4m3b11 %v984
    %vm986 = vweird.f32 %v398
    %v987 = vsel %vm986, 127, %v985
    %v988 = vshrl.u32 %v398, 24
    %v989 = vand.u32 %v988, 128
    %vm990 = vcmp.le.f32.partialorder %v983, 0.0009765625
    %v991 = vsel %vm990, %v989, %v987
    %v992 = vpack.c.b16 %v973, %v964
    %v993 = vpack.c.b16 %v991, %v982
    %v994 = vpack.c.b8 %v993, %v992
    %v996 = vand.u32 2147483647, %v390
    %v997 = vmul.f32 %v390, 0.0625
    %v998 = vcvt.f32.f8e4m3b11 %v997
    %vm999 = vweird.f32 %v390
    %v1000 = vsel %vm999, 127, %v998
    %v1001 = vshrl.u32 %v390, 24
    %v1002 = vand.u32 %v1001, 128
    %vm1003 = vcmp.le.f32.partialorder %v996, 0.0009765625
    %v1004 = vsel %vm1003, %v1002, %v1000
    %v1005 = vand.u32 2147483647, %v393
    %v1006 = vmul.f32 %v393, 0.0625
    %v1007 = vcvt.f32.f8e4m3b11 %v1006
    %vm1008 = vweird.f32 %v393
    %v1009 = vsel %vm1008, 127, %v1007
    %v1010 = vshrl.u32 %v393, 24
    %v1011 = vand.u32 %v1010, 128
    %vm1012 = vcmp.le.f32.partialorder %v1005, 0.0009765625
    %v1013 = vsel %vm1012, %v1011, %v1009
    %v1014 = vand.u32 2147483647, %v396
    %v1015 = vmul.f32 %v396, 0.0625
    %v1016 = vcvt.f32.f8e4m3b11 %v1015
    %vm1017 = vweird.f32 %v396
    %v1018 = vsel %vm1017, 127, %v1016
    %v1019 = vshrl.u32 %v396, 24
    %v1020 = vand.u32 %v1019, 128
    %vm1021 = vcmp.le.f32.partialorder %v1014, 0.0009765625
    %v1022 = vsel %vm1021, %v1020, %v1018
    %v1023 = vand.u32 2147483647, %v399
    %v1024 = vmul.f32 %v399, 0.0625
    %v1025 = vcvt.f32.f8e4m3b11 %v1024
    %vm1026 = vweird.f32 %v399
    %v1027 = vsel %vm1026, 127, %v1025
    %v1028 = vshrl.u32 %v399, 24
    %v1029 = vand.u32 %v1028, 128
    %vm1030 = vcmp.le.f32.partialorder %v1023, 0.0009765625
    %v1031 = vsel %vm1030, %v1029, %v1027
    %v1032 = vpack.c.b16 %v1013, %v1004
    %v1033 = vpack.c.b16 %v1031, %v1022
    %v1034 = vpack.c.b8 %v1033, %v1032
    %v1036 = vand.u32 2147483647, %v400
    %v1037 = vmul.f32 %v400, 0.0625
    %v1038 = vcvt.f32.f8e4m3b11 %v1037
    %vm1039 = vweird.f32 %v400
    %v1040 = vsel %vm1039, 127, %v1038
    %v1041 = vshrl.u32 %v400, 24
    %v1042 = vand.u32 %v1041, 128
    %vm1043 = vcmp.le.f32.partialorder %v1036, 0.0009765625
    %v1044 = vsel %vm1043, %v1042, %v1040
    %v1045 = vand.u32 2147483647, %v403
    %v1046 = vmul.f32 %v403, 0.0625
    %v1047 = vcvt.f32.f8e4m3b11 %v1046
    %vm1048 = vweird.f32 %v403
    %v1049 = vsel %vm1048, 127, %v1047
    %v1050 = vshrl.u32 %v403, 24
    %v1051 = vand.u32 %v1050, 128
    %vm1052 = vcmp.le.f32.partialorder %v1045, 0.0009765625
    %v1053 = vsel %vm1052, %v1051, %v1049
    %v1054 = vand.u32 2147483647, %v406
    %v1055 = vmul.f32 %v406, 0.0625
    %v1056 = vcvt.f32.f8e4m3b11 %v1055
    %vm1057 = vweird.f32 %v406
    %v1058 = vsel %vm1057, 127, %v1056
    %v1059 = vshrl.u32 %v406, 24
    %v1060 = vand.u32 %v1059, 128
    %vm1061 = vcmp.le.f32.partialorder %v1054, 0.0009765625
    %v1062 = vsel %vm1061, %v1060, %v1058
    %v1063 = vand.u32 2147483647, %v409
    %v1064 = vmul.f32 %v409, 0.0625
    %v1065 = vcvt.f32.f8e4m3b11 %v1064
    %vm1066 = vweird.f32 %v409
    %v1067 = vsel %vm1066, 127, %v1065
    %v1068 = vshrl.u32 %v409, 24
    %v1069 = vand.u32 %v1068, 128
    %vm1070 = vcmp.le.f32.partialorder %v1063, 0.0009765625
    %v1071 = vsel %vm1070, %v1069, %v1067
    %v1072 = vpack.c.b16 %v1053, %v1044
    %v1073 = vpack.c.b16 %v1071, %v1062
    %v1074 = vpack.c.b8 %v1073, %v1072
    %v1076 = vand.u32 2147483647, %v401
    %v1077 = vmul.f32 %v401, 0.0625
    %v1078 = vcvt.f32.f8e4m3b11 %v1077
    %vm1079 = vweird.f32 %v401
    %v1080 = vsel %vm1079, 127, %v1078
    %v1081 = vshrl.u32 %v401, 24
    %v1082 = vand.u32 %v1081, 128
    %vm1083 = vcmp.le.f32.partialorder %v1076, 0.0009765625
    %v1084 = vsel %vm1083, %v1082, %v1080
    %v1085 = vand.u32 2147483647, %v404
    %v1086 = vmul.f32 %v404, 0.0625
    %v1087 = vcvt.f32.f8e4m3b11 %v1086
    %vm1088 = vweird.f32 %v404
    %v1089 = vsel %vm1088, 127, %v1087
    %v1090 = vshrl.u32 %v404, 24
    %v1091 = vand.u32 %v1090, 128
    %vm1092 = vcmp.le.f32.partialorder %v1085, 0.0009765625
    %v1093 = vsel %vm1092, %v1091, %v1089
    %v1094 = vand.u32 2147483647, %v407
    %v1095 = vmul.f32 %v407, 0.0625
    %v1096 = vcvt.f32.f8e4m3b11 %v1095
    %vm1097 = vweird.f32 %v407
    %v1098 = vsel %vm1097, 127, %v1096
    %v1099 = vshrl.u32 %v407, 24
    %v1100 = vand.u32 %v1099, 128
    %vm1101 = vcmp.le.f32.partialorder %v1094, 0.0009765625
    %v1102 = vsel %vm1101, %v1100, %v1098
    %v1103 = vand.u32 2147483647, %v410
    %v1104 = vmul.f32 %v410, 0.0625
    %v1105 = vcvt.f32.f8e4m3b11 %v1104
    %vm1106 = vweird.f32 %v410
    %v1107 = vsel %vm1106, 127, %v1105
    %v1108 = vshrl.u32 %v410, 24
    %v1109 = vand.u32 %v1108, 128
    %vm1110 = vcmp.le.f32.partialorder %v1103, 0.0009765625
    %v1111 = vsel %vm1110, %v1109, %v1107
    %v1112 = vpack.c.b16 %v1093, %v1084
    %v1113 = vpack.c.b16 %v1111, %v1102
    %v1114 = vpack.c.b8 %v1113, %v1112
    %v1116 = vand.u32 2147483647, %v402
    %v1117 = vmul.f32 %v402, 0.0625
    %v1118 = vcvt.f32.f8e4m3b11 %v1117
    %vm1119 = vweird.f32 %v402
    %v1120 = vsel %vm1119, 127, %v1118
    %v1121 = vshrl.u32 %v402, 24
    %v1122 = vand.u32 %v1121, 128
    %vm1123 = vcmp.le.f32.partialorder %v1116, 0.0009765625
    %v1124 = vsel %vm1123, %v1122, %v1120
    %v1125 = vand.u32 2147483647, %v405
    %v1126 = vmul.f32 %v405, 0.0625
    %v1127 = vcvt.f32.f8e4m3b11 %v1126
    %vm1128 = vweird.f32 %v405
    %v1129 = vsel %vm1128, 127, %v1127
    %v1130 = vshrl.u32 %v405, 24
    %v1131 = vand.u32 %v1130, 128
    %vm1132 = vcmp.le.f32.partialorder %v1125, 0.0009765625
    %v1133 = vsel %vm1132, %v1131, %v1129
    %v1134 = vand.u32 2147483647, %v408
    %v1135 = vmul.f32 %v408, 0.0625
    %v1136 = vcvt.f32.f8e4m3b11 %v1135
    %vm1137 = vweird.f32 %v408
    %v1138 = vsel %vm1137, 127, %v1136
    %v1139 = vshrl.u32 %v408, 24
    %v1140 = vand.u32 %v1139, 128
    %vm1141 = vcmp.le.f32.partialorder %v1134, 0.0009765625
    %v1142 = vsel %vm1141, %v1140, %v1138
    %v1143 = vand.u32 2147483647, %v411
    %v1144 = vmul.f32 %v411, 0.0625
    %v1145 = vcvt.f32.f8e4m3b11 %v1144
    %vm1146 = vweird.f32 %v411
    %v1147 = vsel %vm1146, 127, %v1145
    %v1148 = vshrl.u32 %v411, 24
    %v1149 = vand.u32 %v1148, 128
    %vm1150 = vcmp.le.f32.partialorder %v1143, 0.0009765625
    %v1151 = vsel %vm1150, %v1149, %v1147
    %v1152 = vpack.c.b16 %v1133, %v1124
    %v1153 = vpack.c.b16 %v1151, %v1142
    %v1154 = vpack.c.b8 %v1153, %v1152
    %v1156 = vand.u32 2147483647, %v412
    %v1157 = vmul.f32 %v412, 0.0625
    %v1158 = vcvt.f32.f8e4m3b11 %v1157
    %vm1159 = vweird.f32 %v412
    %v1160 = vsel %vm1159, 127, %v1158
    %v1161 = vshrl.u32 %v412, 24
    %v1162 = vand.u32 %v1161, 128
    %vm1163 = vcmp.le.f32.partialorder %v1156, 0.0009765625
    %v1164 = vsel %vm1163, %v1162, %v1160
    %v1165 = vand.u32 2147483647, %v415
    %v1166 = vmul.f32 %v415, 0.0625
    %v1167 = vcvt.f32.f8e4m3b11 %v1166
    %vm1168 = vweird.f32 %v415
    %v1169 = vsel %vm1168, 127, %v1167
    %v1170 = vshrl.u32 %v415, 24
    %v1171 = vand.u32 %v1170, 128
    %vm1172 = vcmp.le.f32.partialorder %v1165, 0.0009765625
    %v1173 = vsel %vm1172, %v1171, %v1169
    %v1174 = vand.u32 2147483647, %v418
    %v1175 = vmul.f32 %v418, 0.0625
    %v1176 = vcvt.f32.f8e4m3b11 %v1175
    %vm1177 = vweird.f32 %v418
    %v1178 = vsel %vm1177, 127, %v1176
    %v1179 = vshrl.u32 %v418, 24
    %v1180 = vand.u32 %v1179, 128
    %vm1181 = vcmp.le.f32.partialorder %v1174, 0.0009765625
    %v1182 = vsel %vm1181, %v1180, %v1178
    %v1183 = vand.u32 2147483647, %v421
    %v1184 = vmul.f32 %v421, 0.0625
    %v1185 = vcvt.f32.f8e4m3b11 %v1184
    %vm1186 = vweird.f32 %v421
    %v1187 = vsel %vm1186, 127, %v1185
    %v1188 = vshrl.u32 %v421, 24
    %v1189 = vand.u32 %v1188, 128
    %vm1190 = vcmp.le.f32.partialorder %v1183, 0.0009765625
    %v1191 = vsel %vm1190, %v1189, %v1187
    %v1192 = vpack.c.b16 %v1173, %v1164
    %v1193 = vpack.c.b16 %v1191, %v1182
    %v1194 = vpack.c.b8 %v1193, %v1192
    %v1196 = vand.u32 2147483647, %v413
    %v1197 = vmul.f32 %v413, 0.0625
    %v1198 = vcvt.f32.f8e4m3b11 %v1197
    %vm1199 = vweird.f32 %v413
    %v1200 = vsel %vm1199, 127, %v1198
    %v1201 = vshrl.u32 %v413, 24
    %v1202 = vand.u32 %v1201, 128
    %vm1203 = vcmp.le.f32.partialorder %v1196, 0.0009765625
    %v1204 = vsel %vm1203, %v1202, %v1200
    %v1205 = vand.u32 2147483647, %v416
    %v1206 = vmul.f32 %v416, 0.0625
    %v1207 = vcvt.f32.f8e4m3b11 %v1206
    %vm1208 = vweird.f32 %v416
    %v1209 = vsel %vm1208, 127, %v1207
    %v1210 = vshrl.u32 %v416, 24
    %v1211 = vand.u32 %v1210, 128
    %vm1212 = vcmp.le.f32.partialorder %v1205, 0.0009765625
    %v1213 = vsel %vm1212, %v1211, %v1209
    %v1214 = vand.u32 2147483647, %v419
    %v1215 = vmul.f32 %v419, 0.0625
    %v1216 = vcvt.f32.f8e4m3b11 %v1215
    %vm1217 = vweird.f32 %v419
    %v1218 = vsel %vm1217, 127, %v1216
    %v1219 = vshrl.u32 %v419, 24
    %v1220 = vand.u32 %v1219, 128
    %vm1221 = vcmp.le.f32.partialorder %v1214, 0.0009765625
    %v1222 = vsel %vm1221, %v1220, %v1218
    %v1223 = vand.u32 2147483647, %v422
    %v1224 = vmul.f32 %v422, 0.0625
    %v1225 = vcvt.f32.f8e4m3b11 %v1224
    %vm1226 = vweird.f32 %v422
    %v1227 = vsel %vm1226, 127, %v1225
    %v1228 = vshrl.u32 %v422, 24
    %v1229 = vand.u32 %v1228, 128
    %vm1230 = vcmp.le.f32.partialorder %v1223, 0.0009765625
    %v1231 = vsel %vm1230, %v1229, %v1227
    %v1232 = vpack.c.b16 %v1213, %v1204
    %v1233 = vpack.c.b16 %v1231, %v1222
    %v1234 = vpack.c.b8 %v1233, %v1232
    %v1236 = vand.u32 2147483647, %v414
    %v1237 = vmul.f32 %v414, 0.0625
    %v1238 = vcvt.f32.f8e4m3b11 %v1237
    %vm1239 = vweird.f32 %v414
    %v1240 = vsel %vm1239, 127, %v1238
    %v1241 = vshrl.u32 %v414, 24
    %v1242 = vand.u32 %v1241, 128
    %vm1243 = vcmp.le.f32.partialorder %v1236, 0.0009765625
    %v1244 = vsel %vm1243, %v1242, %v1240
    %v1245 = vand.u32 2147483647, %v417
    %v1246 = vmul.f32 %v417, 0.0625
    %v1247 = vcvt.f32.f8e4m3b11 %v1246
    %vm1248 = vweird.f32 %v417
    %v1249 = vsel %vm1248, 127, %v1247
    %v1250 = vshrl.u32 %v417, 24
    %v1251 = vand.u32 %v1250, 128
    %vm1252 = vcmp.le.f32.partialorder %v1245, 0.0009765625
    %v1253 = vsel %vm1252, %v1251, %v1249
    %v1254 = vand.u32 2147483647, %v420
    %v1255 = vmul.f32 %v420, 0.0625
    %v1256 = vcvt.f32.f8e4m3b11 %v1255
    %vm1257 = vweird.f32 %v420
    %v1258 = vsel %vm1257, 127, %v1256
    %v1259 = vshrl.u32 %v420, 24
    %v1260 = vand.u32 %v1259, 128
    %vm1261 = vcmp.le.f32.partialorder %v1254, 0.0009765625
    %v1262 = vsel %vm1261, %v1260, %v1258
    %v1263 = vand.u32 2147483647, %v423
    %v1264 = vmul.f32 %v423, 0.0625
    %v1265 = vcvt.f32.f8e4m3b11 %v1264
    %vm1266 = vweird.f32 %v423
    %v1267 = vsel %vm1266, 127, %v1265
    %v1268 = vshrl.u32 %v423, 24
    %v1269 = vand.u32 %v1268, 128
    %vm1270 = vcmp.le.f32.partialorder %v1263, 0.0009765625
    %v1271 = vsel %vm1270, %v1269, %v1267
    %v1272 = vpack.c.b16 %v1253, %v1244
    %v1273 = vpack.c.b16 %v1271, %v1262
    %v1274 = vpack.c.b8 %v1273, %v1272
    %v1276 = vand.u32 2147483647, %v424
    %v1277 = vmul.f32 %v424, 0.0625
    %v1278 = vcvt.f32.f8e4m3b11 %v1277
    %vm1279 = vweird.f32 %v424
    %v1280 = vsel %vm1279, 127, %v1278
    %v1281 = vshrl.u32 %v424, 24
    %v1282 = vand.u32 %v1281, 128
    %vm1283 = vcmp.le.f32.partialorder %v1276, 0.0009765625
    %v1284 = vsel %vm1283, %v1282, %v1280
    %v1285 = vand.u32 2147483647, %v427
    %v1286 = vmul.f32 %v427, 0.0625
    %v1287 = vcvt.f32.f8e4m3b11 %v1286
    %vm1288 = vweird.f32 %v427
    %v1289 = vsel %vm1288, 127, %v1287
    %v1290 = vshrl.u32 %v427, 24
    %v1291 = vand.u32 %v1290, 128
    %vm1292 = vcmp.le.f32.partialorder %v1285, 0.0009765625
    %v1293 = vsel %vm1292, %v1291, %v1289
    %v1294 = vand.u32 2147483647, %v430
    %v1295 = vmul.f32 %v430, 0.0625
    %v1296 = vcvt.f32.f8e4m3b11 %v1295
    %vm1297 = vweird.f32 %v430
    %v1298 = vsel %vm1297, 127, %v1296
    %v1299 = vshrl.u32 %v430, 24
    %v1300 = vand.u32 %v1299, 128
    %vm1301 = vcmp.le.f32.partialorder %v1294, 0.0009765625
    %v1302 = vsel %vm1301, %v1300, %v1298
    %v1303 = vand.u32 2147483647, %v433
    %v1304 = vmul.f32 %v433, 0.0625
    %v1305 = vcvt.f32.f8e4m3b11 %v1304
    %vm1306 = vweird.f32 %v433
    %v1307 = vsel %vm1306, 127, %v1305
    %v1308 = vshrl.u32 %v433, 24
    %v1309 = vand.u32 %v1308, 128
    %vm1310 = vcmp.le.f32.partialorder %v1303, 0.0009765625
    %v1311 = vsel %vm1310, %v1309, %v1307
    %v1312 = vpack.c.b16 %v1293, %v1284
    %v1313 = vpack.c.b16 %v1311, %v1302
    %v1314 = vpack.c.b8 %v1313, %v1312
    %v1316 = vand.u32 2147483647, %v425
    %v1317 = vmul.f32 %v425, 0.0625
    %v1318 = vcvt.f32.f8e4m3b11 %v1317
    %vm1319 = vweird.f32 %v425
    %v1320 = vsel %vm1319, 127, %v1318
    %v1321 = vshrl.u32 %v425, 24
    %v1322 = vand.u32 %v1321, 128
    %vm1323 = vcmp.le.f32.partialorder %v1316, 0.0009765625
    %v1324 = vsel %vm1323, %v1322, %v1320
    %v1325 = vand.u32 2147483647, %v428
    %v1326 = vmul.f32 %v428, 0.0625
    %v1327 = vcvt.f32.f8e4m3b11 %v1326
    %vm1328 = vweird.f32 %v428
    %v1329 = vsel %vm1328, 127, %v1327
    %v1330 = vshrl.u32 %v428, 24
    %v1331 = vand.u32 %v1330, 128
    %vm1332 = vcmp.le.f32.partialorder %v1325, 0.0009765625
    %v1333 = vsel %vm1332, %v1331, %v1329
    %v1334 = vand.u32 2147483647, %v431
    %v1335 = vmul.f32 %v431, 0.0625
    %v1336 = vcvt.f32.f8e4m3b11 %v1335
    %vm1337 = vweird.f32 %v431
    %v1338 = vsel %vm1337, 127, %v1336
    %v1339 = vshrl.u32 %v431, 24
    %v1340 = vand.u32 %v1339, 128
    %vm1341 = vcmp.le.f32.partialorder %v1334, 0.0009765625
    %v1342 = vsel %vm1341, %v1340, %v1338
    %v1343 = vand.u32 2147483647, %v434
    %v1344 = vmul.f32 %v434, 0.0625
    %v1345 = vcvt.f32.f8e4m3b11 %v1344
    %vm1346 = vweird.f32 %v434
    %v1347 = vsel %vm1346, 127, %v1345
    %v1348 = vshrl.u32 %v434, 24
    %v1349 = vand.u32 %v1348, 128
    %vm1350 = vcmp.le.f32.partialorder %v1343, 0.0009765625
    %v1351 = vsel %vm1350, %v1349, %v1347
    %v1352 = vpack.c.b16 %v1333, %v1324
    %v1353 = vpack.c.b16 %v1351, %v1342
    %v1354 = vpack.c.b8 %v1353, %v1352
    %v1356 = vand.u32 2147483647, %v426
    %v1357 = vmul.f32 %v426, 0.0625
    %v1358 = vcvt.f32.f8e4m3b11 %v1357
    %vm1359 = vweird.f32 %v426
    %v1360 = vsel %vm1359, 127, %v1358
    %v1361 = vshrl.u32 %v426, 24
    %v1362 = vand.u32 %v1361, 128
    %vm1363 = vcmp.le.f32.partialorder %v1356, 0.0009765625
    %v1364 = vsel %vm1363, %v1362, %v1360
    %v1365 = vand.u32 2147483647, %v429
    %v1366 = vmul.f32 %v429, 0.0625
    %v1367 = vcvt.f32.f8e4m3b11 %v1366
    %vm1368 = vweird.f32 %v429
    %v1369 = vsel %vm1368, 127, %v1367
    %v1370 = vshrl.u32 %v429, 24
    %v1371 = vand.u32 %v1370, 128
    %vm1372 = vcmp.le.f32.partialorder %v1365, 0.0009765625
    %v1373 = vsel %vm1372, %v1371, %v1369
    %v1374 = vand.u32 2147483647, %v432
    %v1375 = vmul.f32 %v432, 0.0625
    %v1376 = vcvt.f32.f8e4m3b11 %v1375
    %vm1377 = vweird.f32 %v432
    %v1378 = vsel %vm1377, 127, %v1376
    %v1379 = vshrl.u32 %v432, 24
    %v1380 = vand.u32 %v1379, 128
    %vm1381 = vcmp.le.f32.partialorder %v1374, 0.0009765625
    %v1382 = vsel %vm1381, %v1380, %v1378
    %v1383 = vand.u32 2147483647, %v435
    %v1384 = vmul.f32 %v435, 0.0625
    %v1385 = vcvt.f32.f8e4m3b11 %v1384
    %vm1386 = vweird.f32 %v435
    %v1387 = vsel %vm1386, 127, %v1385
    %v1388 = vshrl.u32 %v435, 24
    %v1389 = vand.u32 %v1388, 128
    %vm1390 = vcmp.le.f32.partialorder %v1383, 0.0009765625
    %v1391 = vsel %vm1390, %v1389, %v1387
    %v1392 = vpack.c.b16 %v1373, %v1364
    %v1393 = vpack.c.b16 %v1391, %v1382
    %v1394 = vpack.c.b8 %v1393, %v1392
    %1396 = vst [vmem:[#allocation6] sm:$0xff] %v474
    %1397 = vst [vmem:[#allocation6 + $0x8] sm:$0xff] %v514
    %1398 = vst [vmem:[#allocation6 + $0x10] sm:$0xff] %v554
    %1399 = vst [vmem:[#allocation6 + $0x18] sm:$0xff] %v594
    %1400 = vst [vmem:[#allocation6 + $0x20] sm:$0xff] %v634
    %1401 = vst [vmem:[#allocation6 + $0x28] sm:$0xff] %v674
    %1402 = vst [vmem:[#allocation6 + $0x30] sm:$0xff] %v714
    %1403 = vst [vmem:[#allocation6 + $0x38] sm:$0xff] %v754
    %1404 = vst [vmem:[#allocation6 + $0x40] sm:$0xff] %v794
    %1405 = vst [vmem:[#allocation6 + $0x48] sm:$0xff] %v834
    %1406 = vst [vmem:[#allocation6 + $0x50] sm:$0xff] %v874
    %1407 = vst [vmem:[#allocation6 + $0x58] sm:$0xff] %v914
    %1408 = vst [vmem:[#allocation6 + $0x60] sm:$0xff] %v954
    %1409 = vst [vmem:[#allocation6 + $0x68] sm:$0xff] %v994
    %1410 = vst [vmem:[#allocation6 + $0x70] sm:$0xff] %v1034
    %1411 = vst [vmem:[#allocation6 + $0x78] sm:$0xff] %v1074
    %1412 = vst [vmem:[#allocation6 + $0x80] sm:$0xff] %v1114
    %1413 = vst [vmem:[#allocation6 + $0x88] sm:$0xff] %v1154
    %1414 = vst [vmem:[#allocation6 + $0x90] sm:$0xff] %v1194
    %1415 = vst [vmem:[#allocation6 + $0x98] sm:$0xff] %v1234
    %1416 = vst [vmem:[#allocation6 + $0xa0] sm:$0xff] %v1274
    %1417 = vst [vmem:[#allocation6 + $0xa8] sm:$0xff] %v1314
    %1418 = vst [vmem:[#allocation6 + $0xb0] sm:$0xff] %v1354
    %1419 = vst [vmem:[#allocation6 + $0xb8] sm:$0xff] %v1394
    %1420 = vxpose.xlu0.b32.start [1/16] %v340, 128
    %1421 = vxpose.xlu0.b32.cont [2/16] %v343, 128
    %1422 = vxpose.xlu0.b32.cont [3/16] %v346, 128
    %1423 = vxpose.xlu0.b32.cont [4/16] %v349, 128
    %1424 = vxpose.xlu0.b32.cont [5/16] %v352, 128
    %1425 = vxpose.xlu0.b32.cont [6/16] %v355, 128
    %1426 = vxpose.xlu0.b32.cont [7/16] %v358, 128
    %1427 = vxpose.xlu0.b32.cont [8/16] %v361, 128
    %1428 = vxpose.xlu0.b32.cont [9/16] %v364, 128
    %1429 = vxpose.xlu0.b32.cont [10/16] %v367, 128
    %1430 = vxpose.xlu0.b32.cont [11/16] %v370, 128
    %1431 = vxpose.xlu0.b32.cont [12/16] %v373, 128
    %1432 = vxpose.xlu0.b32.cont [13/16] %v376, 128
    %1433 = vxpose.xlu0.b32.cont [14/16] %v379, 128
    %1434 = vxpose.xlu0.b32.cont [15/16] %v382, 128
    %1435 = vxpose.xlu0.b32.end [16/16] %v385, 128
    %v1436 = vpop.trf.xlu0
    %v1437 = vpop.trf.xlu0
    %v1438 = vpop.trf.xlu0
    %v1439 = vpop.trf.xlu0
    %v1440 = vpop.trf.xlu0
    %v1441 = vpop.trf.xlu0
    %v1442 = vpop.trf.xlu0
    %v1443 = vpop.trf.xlu0
    %v1444 = vpop.trf.xlu0
    %v1445 = vpop.trf.xlu0
    %v1446 = vpop.trf.xlu0
    %v1447 = vpop.trf.xlu0
    %v1448 = vpop.trf.xlu0
    %v1449 = vpop.trf.xlu0
    %v1450 = vpop.trf.xlu0
    %v1451 = vpop.trf.xlu0
    %1452 = vxpose.xlu0.b32.start [1/16] %v341, 128
    %1453 = vxpose.xlu0.b32.cont [2/16] %v344, 128
    %1454 = vxpose.xlu0.b32.cont [3/16] %v347, 128
    %1455 = vxpose.xlu0.b32.cont [4/16] %v350, 128
    %1456 = vxpose.xlu0.b32.cont [5/16] %v353, 128
    %1457 = vxpose.xlu0.b32.cont [6/16] %v356, 128
    %1458 = vxpose.xlu0.b32.cont [7/16] %v359, 128
    %1459 = vxpose.xlu0.b32.cont [8/16] %v362, 128
    %1460 = vxpose.xlu0.b32.cont [9/16] %v365, 128
    %1461 = vxpose.xlu0.b32.cont [10/16] %v368, 128
    %1462 = vxpose.xlu0.b32.cont [11/16] %v371, 128
    %1463 = vxpose.xlu0.b32.cont [12/16] %v374, 128
    %1464 = vxpose.xlu0.b32.cont [13/16] %v377, 128
    %1465 = vxpose.xlu0.b32.cont [14/16] %v380, 128
    %1466 = vxpose.xlu0.b32.cont [15/16] %v383, 128
    %1467 = vxpose.xlu0.b32.end [16/16] %v386, 128
    %v1468 = vpop.trf.xlu0
    %v1469 = vpop.trf.xlu0
    %v1470 = vpop.trf.xlu0
    %v1471 = vpop.trf.xlu0
    %v1472 = vpop.trf.xlu0
    %v1473 = vpop.trf.xlu0
    %v1474 = vpop.trf.xlu0
    %v1475 = vpop.trf.xlu0
    %v1476 = vpop.trf.xlu0
    %v1477 = vpop.trf.xlu0
    %v1478 = vpop.trf.xlu0
    %v1479 = vpop.trf.xlu0
    %v1480 = vpop.trf.xlu0
    %v1481 = vpop.trf.xlu0
    %v1482 = vpop.trf.xlu0
    %v1483 = vpop.trf.xlu0
    %1484 = vxpose.xlu0.b32.start [1/16] %v342, 128
    %1485 = vxpose.xlu0.b32.cont [2/16] %v345, 128
    %1486 = vxpose.xlu0.b32.cont [3/16] %v348, 128
    %1487 = vxpose.xlu0.b32.cont [4/16] %v351, 128
    %1488 = vxpose.xlu0.b32.cont [5/16] %v354, 128
    %1489 = vxpose.xlu0.b32.cont [6/16] %v357, 128
    %1490 = vxpose.xlu0.b32.cont [7/16] %v360, 128
    %1491 = vxpose.xlu0.b32.cont [8/16] %v363, 128
    %1492 = vxpose.xlu0.b32.cont [9/16] %v366, 128
    %1493 = vxpose.xlu0.b32.cont [10/16] %v369, 128
    %1494 = vxpose.xlu0.b32.cont [11/16] %v372, 128
    %1495 = vxpose.xlu0.b32.cont [12/16] %v375, 128
    %1496 = vxpose.xlu0.b32.cont [13/16] %v378, 128
    %1497 = vxpose.xlu0.b32.cont [14/16] %v381, 128
    %1498 = vxpose.xlu0.b32.cont [15/16] %v384, 128
    %1499 = vxpose.xlu0.b32.end [16/16] %v387, 128
    %v1500 = vpop.trf.xlu0
    %v1501 = vpop.trf.xlu0
    %v1502 = vpop.trf.xlu0
    %v1503 = vpop.trf.xlu0
    %v1504 = vpop.trf.xlu0
    %v1505 = vpop.trf.xlu0
    %v1506 = vpop.trf.xlu0
    %v1507 = vpop.trf.xlu0
    %v1508 = vpop.trf.xlu0
    %v1509 = vpop.trf.xlu0
    %v1510 = vpop.trf.xlu0
    %v1511 = vpop.trf.xlu0
    %v1512 = vpop.trf.xlu0
    %v1513 = vpop.trf.xlu0
    %v1514 = vpop.trf.xlu0
    %v1515 = vpop.trf.xlu0
    %1516 = vxpose.xlu0.b32.start [1/16] %v388, 128
    %1517 = vxpose.xlu0.b32.cont [2/16] %v391, 128
    %1518 = vxpose.xlu0.b32.cont [3/16] %v394, 128
    %1519 = vxpose.xlu0.b32.cont [4/16] %v397, 128
    %1520 = vxpose.xlu0.b32.cont [5/16] %v400, 128
    %1521 = vxpose.xlu0.b32.cont [6/16] %v403, 128
    %1522 = vxpose.xlu0.b32.cont [7/16] %v406, 128
    %1523 = vxpose.xlu0.b32.cont [8/16] %v409, 128
    %1524 = vxpose.xlu0.b32.cont [9/16] %v412, 128
    %1525 = vxpose.xlu0.b32.cont [10/16] %v415, 128
    %1526 = vxpose.xlu0.b32.cont [11/16] %v418, 128
    %1527 = vxpose.xlu0.b32.cont [12/16] %v421, 128
    %1528 = vxpose.xlu0.b32.cont [13/16] %v424, 128
    %1529 = vxpose.xlu0.b32.cont [14/16] %v427, 128
    %1530 = vxpose.xlu0.b32.cont [15/16] %v430, 128
    %1531 = vxpose.xlu0.b32.end [16/16] %v433, 128
    %v1532 = vpop.trf.xlu0
    %v1533 = vpop.trf.xlu0
    %v1534 = vpop.trf.xlu0
    %v1535 = vpop.trf.xlu0
    %v1536 = vpop.trf.xlu0
    %v1537 = vpop.trf.xlu0
    %v1538 = vpop.trf.xlu0
    %v1539 = vpop.trf.xlu0
    %v1540 = vpop.trf.xlu0
    %v1541 = vpop.trf.xlu0
    %v1542 = vpop.trf.xlu0
    %v1543 = vpop.trf.xlu0
    %v1544 = vpop.trf.xlu0
    %v1545 = vpop.trf.xlu0
    %v1546 = vpop.trf.xlu0
    %v1547 = vpop.trf.xlu0
    %1548 = vxpose.xlu0.b32.start [1/16] %v389, 128
    %1549 = vxpose.xlu0.b32.cont [2/16] %v392, 128
    %1550 = vxpose.xlu0.b32.cont [3/16] %v395, 128
    %1551 = vxpose.xlu0.b32.cont [4/16] %v398, 128
    %1552 = vxpose.xlu0.b32.cont [5/16] %v401, 128
    %1553 = vxpose.xlu0.b32.cont [6/16] %v404, 128
    %1554 = vxpose.xlu0.b32.cont [7/16] %v407, 128
    %1555 = vxpose.xlu0.b32.cont [8/16] %v410, 128
    %1556 = vxpose.xlu0.b32.cont [9/16] %v413, 128
    %1557 = vxpose.xlu0.b32.cont [10/16] %v416, 128
    %1558 = vxpose.xlu0.b32.cont [11/16] %v419, 128
    %1559 = vxpose.xlu0.b32.cont [12/16] %v422, 128
    %1560 = vxpose.xlu0.b32.cont [13/16] %v425, 128
    %1561 = vxpose.xlu0.b32.cont [14/16] %v428, 128
    %1562 = vxpose.xlu0.b32.cont [15/16] %v431, 128
    %1563 = vxpose.xlu0.b32.end [16/16] %v434, 128
    %v1564 = vpop.trf.xlu0
    %v1565 = vpop.trf.xlu0
    %v1566 = vpop.trf.xlu0
    %v1567 = vpop.trf.xlu0
    %v1568 = vpop.trf.xlu0
    %v1569 = vpop.trf.xlu0
    %v1570 = vpop.trf.xlu0
    %v1571 = vpop.trf.xlu0
    %v1572 = vpop.trf.xlu0
    %v1573 = vpop.trf.xlu0
    %v1574 = vpop.trf.xlu0
    %v1575 = vpop.trf.xlu0
    %v1576 = vpop.trf.xlu0
    %v1577 = vpop.trf.xlu0
    %v1578 = vpop.trf.xlu0
    %v1579 = vpop.trf.xlu0
    %1580 = vxpose.xlu0.b32.start [1/16] %v390, 128
    %1581 = vxpose.xlu0.b32.cont [2/16] %v393, 128
    %1582 = vxpose.xlu0.b32.cont [3/16] %v396, 128
    %1583 = vxpose.xlu0.b32.cont [4/16] %v399, 128
    %1584 = vxpose.xlu0.b32.cont [5/16] %v402, 128
    %1585 = vxpose.xlu0.b32.cont [6/16] %v405, 128
    %1586 = vxpose.xlu0.b32.cont [7/16] %v408, 128
    %1587 = vxpose.xlu0.b32.cont [8/16] %v411, 128
    %1588 = vxpose.xlu0.b32.cont [9/16] %v414, 128
    %1589 = vxpose.xlu0.b32.cont [10/16] %v417, 128
    %1590 = vxpose.xlu0.b32.cont [11/16] %v420, 128
    %1591 = vxpose.xlu0.b32.cont [12/16] %v423, 128
    %1592 = vxpose.xlu0.b32.cont [13/16] %v426, 128
    %1593 = vxpose.xlu0.b32.cont [14/16] %v429, 128
    %1594 = vxpose.xlu0.b32.cont [15/16] %v432, 128
    %1595 = vxpose.xlu0.b32.end [16/16] %v435, 128
    %v1596 = vpop.trf.xlu0
    %v1597 = vpop.trf.xlu0
    %v1598 = vpop.trf.xlu0
    %v1599 = vpop.trf.xlu0
    %v1600 = vpop.trf.xlu0
    %v1601 = vpop.trf.xlu0
    %v1602 = vpop.trf.xlu0
    %v1603 = vpop.trf.xlu0
    %v1604 = vpop.trf.xlu0
    %v1605 = vpop.trf.xlu0
    %v1606 = vpop.trf.xlu0
    %v1607 = vpop.trf.xlu0
    %v1608 = vpop.trf.xlu0
    %v1609 = vpop.trf.xlu0
    %v1610 = vpop.trf.xlu0
    %v1611 = vpop.trf.xlu0
    %v1612 = vand.u32 2147483647, %v1436
    %v1613 = vmul.f32 %v1436, 0.0625
    %v1614 = vcvt.f32.f8e4m3b11 %v1613
    %vm1615 = vweird.f32 %v1436
    %v1616 = vsel %vm1615, 127, %v1614
    %v1617 = vshrl.u32 %v1436, 24
    %v1618 = vand.u32 %v1617, 128
    %vm1619 = vcmp.le.f32.partialorder %v1612, 0.0009765625
    %v1620 = vsel %vm1619, %v1618, %v1616
    %v1621 = vand.u32 2147483647, %v1437
    %v1622 = vmul.f32 %v1437, 0.0625
    %v1623 = vcvt.f32.f8e4m3b11 %v1622
    %vm1624 = vweird.f32 %v1437
    %v1625 = vsel %vm1624, 127, %v1623
    %v1626 = vshrl.u32 %v1437, 24
    %v1627 = vand.u32 %v1626, 128
    %vm1628 = vcmp.le.f32.partialorder %v1621, 0.0009765625
    %v1629 = vsel %vm1628, %v1627, %v1625
    %v1630 = vand.u32 2147483647, %v1438
    %v1631 = vmul.f32 %v1438, 0.0625
    %v1632 = vcvt.f32.f8e4m3b11 %v1631
    %vm1633 = vweird.f32 %v1438
    %v1634 = vsel %vm1633, 127, %v1632
    %v1635 = vshrl.u32 %v1438, 24
    %v1636 = vand.u32 %v1635, 128
    %vm1637 = vcmp.le.f32.partialorder %v1630, 0.0009765625
    %v1638 = vsel %vm1637, %v1636, %v1634
    %v1639 = vand.u32 2147483647, %v1439
    %v1640 = vmul.f32 %v1439, 0.0625
    %v1641 = vcvt.f32.f8e4m3b11 %v1640
    %vm1642 = vweird.f32 %v1439
    %v1643 = vsel %vm1642, 127, %v1641
    %v1644 = vshrl.u32 %v1439, 24
    %v1645 = vand.u32 %v1644, 128
    %vm1646 = vcmp.le.f32.partialorder %v1639, 0.0009765625
    %v1647 = vsel %vm1646, %v1645, %v1643
    %v1648 = vpack.c.b16 %v1629, %v1620
    %v1649 = vpack.c.b16 %v1647, %v1638
    %v1650 = vpack.c.b8 %v1649, %v1648
    %v1652 = vand.u32 2147483647, %v1532
    %v1653 = vmul.f32 %v1532, 0.0625
    %v1654 = vcvt.f32.f8e4m3b11 %v1653
    %vm1655 = vweird.f32 %v1532
    %v1656 = vsel %vm1655, 127, %v1654
    %v1657 = vshrl.u32 %v1532, 24
    %v1658 = vand.u32 %v1657, 128
    %vm1659 = vcmp.le.f32.partialorder %v1652, 0.0009765625
    %v1660 = vsel %vm1659, %v1658, %v1656
    %v1661 = vand.u32 2147483647, %v1533
    %v1662 = vmul.f32 %v1533, 0.0625
    %v1663 = vcvt.f32.f8e4m3b11 %v1662
    %vm1664 = vweird.f32 %v1533
    %v1665 = vsel %vm1664, 127, %v1663
    %v1666 = vshrl.u32 %v1533, 24
    %v1667 = vand.u32 %v1666, 128
    %vm1668 = vcmp.le.f32.partialorder %v1661, 0.0009765625
    %v1669 = vsel %vm1668, %v1667, %v1665
    %v1670 = vand.u32 2147483647, %v1534
    %v1671 = vmul.f32 %v1534, 0.0625
    %v1672 = vcvt.f32.f8e4m3b11 %v1671
    %vm1673 = vweird.f32 %v1534
    %v1674 = vsel %vm1673, 127, %v1672
    %v1675 = vshrl.u32 %v1534, 24
    %v1676 = vand.u32 %v1675, 128
    %vm1677 = vcmp.le.f32.partialorder %v1670, 0.0009765625
    %v1678 = vsel %vm1677, %v1676, %v1674
    %v1679 = vand.u32 2147483647, %v1535
    %v1680 = vmul.f32 %v1535, 0.0625
    %v1681 = vcvt.f32.f8e4m3b11 %v1680
    %vm1682 = vweird.f32 %v1535
    %v1683 = vsel %vm1682, 127, %v1681
    %v1684 = vshrl.u32 %v1535, 24
    %v1685 = vand.u32 %v1684, 128
    %vm1686 = vcmp.le.f32.partialorder %v1679, 0.0009765625
    %v1687 = vsel %vm1686, %v1685, %v1683
    %v1688 = vpack.c.b16 %v1669, %v1660
    %v1689 = vpack.c.b16 %v1687, %v1678
    %v1690 = vpack.c.b8 %v1689, %v1688
    %v1692 = vand.u32 2147483647, %v1440
    %v1693 = vmul.f32 %v1440, 0.0625
    %v1694 = vcvt.f32.f8e4m3b11 %v1693
    %vm1695 = vweird.f32 %v1440
    %v1696 = vsel %vm1695, 127, %v1694
    %v1697 = vshrl.u32 %v1440, 24
    %v1698 = vand.u32 %v1697, 128
    %vm1699 = vcmp.le.f32.partialorder %v1692, 0.0009765625
    %v1700 = vsel %vm1699, %v1698, %v1696
    %v1701 = vand.u32 2147483647, %v1441
    %v1702 = vmul.f32 %v1441, 0.0625
    %v1703 = vcvt.f32.f8e4m3b11 %v1702
    %vm1704 = vweird.f32 %v1441
    %v1705 = vsel %vm1704, 127, %v1703
    %v1706 = vshrl.u32 %v1441, 24
    %v1707 = vand.u32 %v1706, 128
    %vm1708 = vcmp.le.f32.partialorder %v1701, 0.0009765625
    %v1709 = vsel %vm1708, %v1707, %v1705
    %v1710 = vand.u32 2147483647, %v1442
    %v1711 = vmul.f32 %v1442, 0.0625
    %v1712 = vcvt.f32.f8e4m3b11 %v1711
    %vm1713 = vweird.f32 %v1442
    %v1714 = vsel %vm1713, 127, %v1712
    %v1715 = vshrl.u32 %v1442, 24
    %v1716 = vand.u32 %v1715, 128
    %vm1717 = vcmp.le.f32.partialorder %v1710, 0.0009765625
    %v1718 = vsel %vm1717, %v1716, %v1714
    %v1719 = vand.u32 2147483647, %v1443
    %v1720 = vmul.f32 %v1443, 0.0625
    %v1721 = vcvt.f32.f8e4m3b11 %v1720
    %vm1722 = vweird.f32 %v1443
    %v1723 = vsel %vm1722, 127, %v1721
    %v1724 = vshrl.u32 %v1443, 24
    %v1725 = vand.u32 %v1724, 128
    %vm1726 = vcmp.le.f32.partialorder %v1719, 0.0009765625
    %v1727 = vsel %vm1726, %v1725, %v1723
    %v1728 = vpack.c.b16 %v1709, %v1700
    %v1729 = vpack.c.b16 %v1727, %v1718
    %v1730 = vpack.c.b8 %v1729, %v1728
    %v1732 = vand.u32 2147483647, %v1536
    %v1733 = vmul.f32 %v1536, 0.0625
    %v1734 = vcvt.f32.f8e4m3b11 %v1733
    %vm1735 = vweird.f32 %v1536
    %v1736 = vsel %vm1735, 127, %v1734
    %v1737 = vshrl.u32 %v1536, 24
    %v1738 = vand.u32 %v1737, 128
    %vm1739 = vcmp.le.f32.partialorder %v1732, 0.0009765625
    %v1740 = vsel %vm1739, %v1738, %v1736
    %v1741 = vand.u32 2147483647, %v1537
    %v1742 = vmul.f32 %v1537, 0.0625
    %v1743 = vcvt.f32.f8e4m3b11 %v1742
    %vm1744 = vweird.f32 %v1537
    %v1745 = vsel %vm1744, 127, %v1743
    %v1746 = vshrl.u32 %v1537, 24
    %v1747 = vand.u32 %v1746, 128
    %vm1748 = vcmp.le.f32.partialorder %v1741, 0.0009765625
    %v1749 = vsel %vm1748, %v1747, %v1745
    %v1750 = vand.u32 2147483647, %v1538
    %v1751 = vmul.f32 %v1538, 0.0625
    %v1752 = vcvt.f32.f8e4m3b11 %v1751
    %vm1753 = vweird.f32 %v1538
    %v1754 = vsel %vm1753, 127, %v1752
    %v1755 = vshrl.u32 %v1538, 24
    %v1756 = vand.u32 %v1755, 128
    %vm1757 = vcmp.le.f32.partialorder %v1750, 0.0009765625
    %v1758 = vsel %vm1757, %v1756, %v1754
    %v1759 = vand.u32 2147483647, %v1539
    %v1760 = vmul.f32 %v1539, 0.0625
    %v1761 = vcvt.f32.f8e4m3b11 %v1760
    %vm1762 = vweird.f32 %v1539
    %v1763 = vsel %vm1762, 127, %v1761
    %v1764 = vshrl.u32 %v1539, 24
    %v1765 = vand.u32 %v1764, 128
    %vm1766 = vcmp.le.f32.partialorder %v1759, 0.0009765625
    %v1767 = vsel %vm1766, %v1765, %v1763
    %v1768 = vpack.c.b16 %v1749, %v1740
    %v1769 = vpack.c.b16 %v1767, %v1758
    %v1770 = vpack.c.b8 %v1769, %v1768
    %v1772 = vand.u32 2147483647, %v1444
    %v1773 = vmul.f32 %v1444, 0.0625
    %v1774 = vcvt.f32.f8e4m3b11 %v1773
    %vm1775 = vweird.f32 %v1444
    %v1776 = vsel %vm1775, 127, %v1774
    %v1777 = vshrl.u32 %v1444, 24
    %v1778 = vand.u32 %v1777, 128
    %vm1779 = vcmp.le.f32.partialorder %v1772, 0.0009765625
    %v1780 = vsel %vm1779, %v1778, %v1776
    %v1781 = vand.u32 2147483647, %v1445
    %v1782 = vmul.f32 %v1445, 0.0625
    %v1783 = vcvt.f32.f8e4m3b11 %v1782
    %vm1784 = vweird.f32 %v1445
    %v1785 = vsel %vm1784, 127, %v1783
    %v1786 = vshrl.u32 %v1445, 24
    %v1787 = vand.u32 %v1786, 128
    %vm1788 = vcmp.le.f32.partialorder %v1781, 0.0009765625
    %v1789 = vsel %vm1788, %v1787, %v1785
    %v1790 = vand.u32 2147483647, %v1446
    %v1791 = vmul.f32 %v1446, 0.0625
    %v1792 = vcvt.f32.f8e4m3b11 %v1791
    %vm1793 = vweird.f32 %v1446
    %v1794 = vsel %vm1793, 127, %v1792
    %v1795 = vshrl.u32 %v1446, 24
    %v1796 = vand.u32 %v1795, 128
    %vm1797 = vcmp.le.f32.partialorder %v1790, 0.0009765625
    %v1798 = vsel %vm1797, %v1796, %v1794
    %v1799 = vand.u32 2147483647, %v1447
    %v1800 = vmul.f32 %v1447, 0.0625
    %v1801 = vcvt.f32.f8e4m3b11 %v1800
    %vm1802 = vweird.f32 %v1447
    %v1803 = vsel %vm1802, 127, %v1801
    %v1804 = vshrl.u32 %v1447, 24
    %v1805 = vand.u32 %v1804, 128
    %vm1806 = vcmp.le.f32.partialorder %v1799, 0.0009765625
    %v1807 = vsel %vm1806, %v1805, %v1803
    %v1808 = vpack.c.b16 %v1789, %v1780
    %v1809 = vpack.c.b16 %v1807, %v1798
    %v1810 = vpack.c.b8 %v1809, %v1808
    %v1812 = vand.u32 2147483647, %v1540
    %v1813 = vmul.f32 %v1540, 0.0625
    %v1814 = vcvt.f32.f8e4m3b11 %v1813
    %vm1815 = vweird.f32 %v1540
    %v1816 = vsel %vm1815, 127, %v1814
    %v1817 = vshrl.u32 %v1540, 24
    %v1818 = vand.u32 %v1817, 128
    %vm1819 = vcmp.le.f32.partialorder %v1812, 0.0009765625
    %v1820 = vsel %vm1819, %v1818, %v1816
    %v1821 = vand.u32 2147483647, %v1541
    %v1822 = vmul.f32 %v1541, 0.0625
    %v1823 = vcvt.f32.f8e4m3b11 %v1822
    %vm1824 = vweird.f32 %v1541
    %v1825 = vsel %vm1824, 127, %v1823
    %v1826 = vshrl.u32 %v1541, 24
    %v1827 = vand.u32 %v1826, 128
    %vm1828 = vcmp.le.f32.partialorder %v1821, 0.0009765625
    %v1829 = vsel %vm1828, %v1827, %v1825
    %v1830 = vand.u32 2147483647, %v1542
    %v1831 = vmul.f32 %v1542, 0.0625
    %v1832 = vcvt.f32.f8e4m3b11 %v1831
    %vm1833 = vweird.f32 %v1542
    %v1834 = vsel %vm1833, 127, %v1832
    %v1835 = vshrl.u32 %v1542, 24
    %v1836 = vand.u32 %v1835, 128
    %vm1837 = vcmp.le.f32.partialorder %v1830, 0.0009765625
    %v1838 = vsel %vm1837, %v1836, %v1834
    %v1839 = vand.u32 2147483647, %v1543
    %v1840 = vmul.f32 %v1543, 0.0625
    %v1841 = vcvt.f32.f8e4m3b11 %v1840
    %vm1842 = vweird.f32 %v1543
    %v1843 = vsel %vm1842, 127, %v1841
    %v1844 = vshrl.u32 %v1543, 24
    %v1845 = vand.u32 %v1844, 128
    %vm1846 = vcmp.le.f32.partialorder %v1839, 0.0009765625
    %v1847 = vsel %vm1846, %v1845, %v1843
    %v1848 = vpack.c.b16 %v1829, %v1820
    %v1849 = vpack.c.b16 %v1847, %v1838
    %v1850 = vpack.c.b8 %v1849, %v1848
    %v1852 = vand.u32 2147483647, %v1448
    %v1853 = vmul.f32 %v1448, 0.0625
    %v1854 = vcvt.f32.f8e4m3b11 %v1853
    %vm1855 = vweird.f32 %v1448
    %v1856 = vsel %vm1855, 127, %v1854
    %v1857 = vshrl.u32 %v1448, 24
    %v1858 = vand.u32 %v1857, 128
    %vm1859 = vcmp.le.f32.partialorder %v1852, 0.0009765625
    %v1860 = vsel %vm1859, %v1858, %v1856
    %v1861 = vand.u32 2147483647, %v1449
    %v1862 = vmul.f32 %v1449, 0.0625
    %v1863 = vcvt.f32.f8e4m3b11 %v1862
    %vm1864 = vweird.f32 %v1449
    %v1865 = vsel %vm1864, 127, %v1863
    %v1866 = vshrl.u32 %v1449, 24
    %v1867 = vand.u32 %v1866, 128
    %vm1868 = vcmp.le.f32.partialorder %v1861, 0.0009765625
    %v1869 = vsel %vm1868, %v1867, %v1865
    %v1870 = vand.u32 2147483647, %v1450
    %v1871 = vmul.f32 %v1450, 0.0625
    %v1872 = vcvt.f32.f8e4m3b11 %v1871
    %vm1873 = vweird.f32 %v1450
    %v1874 = vsel %vm1873, 127, %v1872
    %v1875 = vshrl.u32 %v1450, 24
    %v1876 = vand.u32 %v1875, 128
    %vm1877 = vcmp.le.f32.partialorder %v1870, 0.0009765625
    %v1878 = vsel %vm1877, %v1876, %v1874
    %v1879 = vand.u32 2147483647, %v1451
    %v1880 = vmul.f32 %v1451, 0.0625
    %v1881 = vcvt.f32.f8e4m3b11 %v1880
    %vm1882 = vweird.f32 %v1451
    %v1883 = vsel %vm1882, 127, %v1881
    %v1884 = vshrl.u32 %v1451, 24
    %v1885 = vand.u32 %v1884, 128
    %vm1886 = vcmp.le.f32.partialorder %v1879, 0.0009765625
    %v1887 = vsel %vm1886, %v1885, %v1883
    %v1888 = vpack.c.b16 %v1869, %v1860
    %v1889 = vpack.c.b16 %v1887, %v1878
    %v1890 = vpack.c.b8 %v1889, %v1888
    %v1892 = vand.u32 2147483647, %v1544
    %v1893 = vmul.f32 %v1544, 0.0625
    %v1894 = vcvt.f32.f8e4m3b11 %v1893
    %vm1895 = vweird.f32 %v1544
    %v1896 = vsel %vm1895, 127, %v1894
    %v1897 = vshrl.u32 %v1544, 24
    %v1898 = vand.u32 %v1897, 128
    %vm1899 = vcmp.le.f32.partialorder %v1892, 0.0009765625
    %v1900 = vsel %vm1899, %v1898, %v1896
    %v1901 = vand.u32 2147483647, %v1545
    %v1902 = vmul.f32 %v1545, 0.0625
    %v1903 = vcvt.f32.f8e4m3b11 %v1902
    %vm1904 = vweird.f32 %v1545
    %v1905 = vsel %vm1904, 127, %v1903
    %v1906 = vshrl.u32 %v1545, 24
    %v1907 = vand.u32 %v1906, 128
    %vm1908 = vcmp.le.f32.partialorder %v1901, 0.0009765625
    %v1909 = vsel %vm1908, %v1907, %v1905
    %v1910 = vand.u32 2147483647, %v1546
    %v1911 = vmul.f32 %v1546, 0.0625
    %v1912 = vcvt.f32.f8e4m3b11 %v1911
    %vm1913 = vweird.f32 %v1546
    %v1914 = vsel %vm1913, 127, %v1912
    %v1915 = vshrl.u32 %v1546, 24
    %v1916 = vand.u32 %v1915, 128
    %vm1917 = vcmp.le.f32.partialorder %v1910, 0.0009765625
    %v1918 = vsel %vm1917, %v1916, %v1914
    %v1919 = vand.u32 2147483647, %v1547
    %v1920 = vmul.f32 %v1547, 0.0625
    %v1921 = vcvt.f32.f8e4m3b11 %v1920
    %vm1922 = vweird.f32 %v1547
    %v1923 = vsel %vm1922, 127, %v1921
    %v1924 = vshrl.u32 %v1547, 24
    %v1925 = vand.u32 %v1924, 128
    %vm1926 = vcmp.le.f32.partialorder %v1919, 0.0009765625
    %v1927 = vsel %vm1926, %v1925, %v1923
    %v1928 = vpack.c.b16 %v1909, %v1900
    %v1929 = vpack.c.b16 %v1927, %v1918
    %v1930 = vpack.c.b8 %v1929, %v1928
    %v1932 = vand.u32 2147483647, %v1468
    %v1933 = vmul.f32 %v1468, 0.0625
    %v1934 = vcvt.f32.f8e4m3b11 %v1933
    %vm1935 = vweird.f32 %v1468
    %v1936 = vsel %vm1935, 127, %v1934
    %v1937 = vshrl.u32 %v1468, 24
    %v1938 = vand.u32 %v1937, 128
    %vm1939 = vcmp.le.f32.partialorder %v1932, 0.0009765625
    %v1940 = vsel %vm1939, %v1938, %v1936
    %v1941 = vand.u32 2147483647, %v1469
    %v1942 = vmul.f32 %v1469, 0.0625
    %v1943 = vcvt.f32.f8e4m3b11 %v1942
    %vm1944 = vweird.f32 %v1469
    %v1945 = vsel %vm1944, 127, %v1943
    %v1946 = vshrl.u32 %v1469, 24
    %v1947 = vand.u32 %v1946, 128
    %vm1948 = vcmp.le.f32.partialorder %v1941, 0.0009765625
    %v1949 = vsel %vm1948, %v1947, %v1945
    %v1950 = vand.u32 2147483647, %v1470
    %v1951 = vmul.f32 %v1470, 0.0625
    %v1952 = vcvt.f32.f8e4m3b11 %v1951
    %vm1953 = vweird.f32 %v1470
    %v1954 = vsel %vm1953, 127, %v1952
    %v1955 = vshrl.u32 %v1470, 24
    %v1956 = vand.u32 %v1955, 128
    %vm1957 = vcmp.le.f32.partialorder %v1950, 0.0009765625
    %v1958 = vsel %vm1957, %v1956, %v1954
    %v1959 = vand.u32 2147483647, %v1471
    %v1960 = vmul.f32 %v1471, 0.0625
    %v1961 = vcvt.f32.f8e4m3b11 %v1960
    %vm1962 = vweird.f32 %v1471
    %v1963 = vsel %vm1962, 127, %v1961
    %v1964 = vshrl.u32 %v1471, 24
    %v1965 = vand.u32 %v1964, 128
    %vm1966 = vcmp.le.f32.partialorder %v1959, 0.0009765625
    %v1967 = vsel %vm1966, %v1965, %v1963
    %v1968 = vpack.c.b16 %v1949, %v1940
    %v1969 = vpack.c.b16 %v1967, %v1958
    %v1970 = vpack.c.b8 %v1969, %v1968
    %v1972 = vand.u32 2147483647, %v1564
    %v1973 = vmul.f32 %v1564, 0.0625
    %v1974 = vcvt.f32.f8e4m3b11 %v1973
    %vm1975 = vweird.f32 %v1564
    %v1976 = vsel %vm1975, 127, %v1974
    %v1977 = vshrl.u32 %v1564, 24
    %v1978 = vand.u32 %v1977, 128
    %vm1979 = vcmp.le.f32.partialorder %v1972, 0.0009765625
    %v1980 = vsel %vm1979, %v1978, %v1976
    %v1981 = vand.u32 2147483647, %v1565
    %v1982 = vmul.f32 %v1565, 0.0625
    %v1983 = vcvt.f32.f8e4m3b11 %v1982
    %vm1984 = vweird.f32 %v1565
    %v1985 = vsel %vm1984, 127, %v1983
    %v1986 = vshrl.u32 %v1565, 24
    %v1987 = vand.u32 %v1986, 128
    %vm1988 = vcmp.le.f32.partialorder %v1981, 0.0009765625
    %v1989 = vsel %vm1988, %v1987, %v1985
    %v1990 = vand.u32 2147483647, %v1566
    %v1991 = vmul.f32 %v1566, 0.0625
    %v1992 = vcvt.f32.f8e4m3b11 %v1991
    %vm1993 = vweird.f32 %v1566
    %v1994 = vsel %vm1993, 127, %v1992
    %v1995 = vshrl.u32 %v1566, 24
    %v1996 = vand.u32 %v1995, 128
    %vm1997 = vcmp.le.f32.partialorder %v1990, 0.0009765625
    %v1998 = vsel %vm1997, %v1996, %v1994
    %v1999 = vand.u32 2147483647, %v1567
    %v2000 = vmul.f32 %v1567, 0.0625
    %v2001 = vcvt.f32.f8e4m3b11 %v2000
    %vm2002 = vweird.f32 %v1567
    %v2003 = vsel %vm2002, 127, %v2001
    %v2004 = vshrl.u32 %v1567, 24
    %v2005 = vand.u32 %v2004, 128
    %vm2006 = vcmp.le.f32.partialorder %v1999, 0.0009765625
    %v2007 = vsel %vm2006, %v2005, %v2003
    %v2008 = vpack.c.b16 %v1989, %v1980
    %v2009 = vpack.c.b16 %v2007, %v1998
    %v2010 = vpack.c.b8 %v2009, %v2008
    %v2012 = vand.u32 2147483647, %v1472
    %v2013 = vmul.f32 %v1472, 0.0625
    %v2014 = vcvt.f32.f8e4m3b11 %v2013
    %vm2015 = vweird.f32 %v1472
    %v2016 = vsel %vm2015, 127, %v2014
    %v2017 = vshrl.u32 %v1472, 24
    %v2018 = vand.u32 %v2017, 128
    %vm2019 = vcmp.le.f32.partialorder %v2012, 0.0009765625
    %v2020 = vsel %vm2019, %v2018, %v2016
    %v2021 = vand.u32 2147483647, %v1473
    %v2022 = vmul.f32 %v1473, 0.0625
    %v2023 = vcvt.f32.f8e4m3b11 %v2022
    %vm2024 = vweird.f32 %v1473
    %v2025 = vsel %vm2024, 127, %v2023
    %v2026 = vshrl.u32 %v1473, 24
    %v2027 = vand.u32 %v2026, 128
    %vm2028 = vcmp.le.f32.partialorder %v2021, 0.0009765625
    %v2029 = vsel %vm2028, %v2027, %v2025
    %v2030 = vand.u32 2147483647, %v1474
    %v2031 = vmul.f32 %v1474, 0.0625
    %v2032 = vcvt.f32.f8e4m3b11 %v2031
    %vm2033 = vweird.f32 %v1474
    %v2034 = vsel %vm2033, 127, %v2032
    %v2035 = vshrl.u32 %v1474, 24
    %v2036 = vand.u32 %v2035, 128
    %vm2037 = vcmp.le.f32.partialorder %v2030, 0.0009765625
    %v2038 = vsel %vm2037, %v2036, %v2034
    %v2039 = vand.u32 2147483647, %v1475
    %v2040 = vmul.f32 %v1475, 0.0625
    %v2041 = vcvt.f32.f8e4m3b11 %v2040
    %vm2042 = vweird.f32 %v1475
    %v2043 = vsel %vm2042, 127, %v2041
    %v2044 = vshrl.u32 %v1475, 24
    %v2045 = vand.u32 %v2044, 128
    %vm2046 = vcmp.le.f32.partialorder %v2039, 0.0009765625
    %v2047 = vsel %vm2046, %v2045, %v2043
    %v2048 = vpack.c.b16 %v2029, %v2020
    %v2049 = vpack.c.b16 %v2047, %v2038
    %v2050 = vpack.c.b8 %v2049, %v2048
    %v2052 = vand.u32 2147483647, %v1568
    %v2053 = vmul.f32 %v1568, 0.0625
    %v2054 = vcvt.f32.f8e4m3b11 %v2053
    %vm2055 = vweird.f32 %v1568
    %v2056 = vsel %vm2055, 127, %v2054
    %v2057 = vshrl.u32 %v1568, 24
    %v2058 = vand.u32 %v2057, 128
    %vm2059 = vcmp.le.f32.partialorder %v2052, 0.0009765625
    %v2060 = vsel %vm2059, %v2058, %v2056
    %v2061 = vand.u32 2147483647, %v1569
    %v2062 = vmul.f32 %v1569, 0.0625
    %v2063 = vcvt.f32.f8e4m3b11 %v2062
    %vm2064 = vweird.f32 %v1569
    %v2065 = vsel %vm2064, 127, %v2063
    %v2066 = vshrl.u32 %v1569, 24
    %v2067 = vand.u32 %v2066, 128
    %vm2068 = vcmp.le.f32.partialorder %v2061, 0.0009765625
    %v2069 = vsel %vm2068, %v2067, %v2065
    %v2070 = vand.u32 2147483647, %v1570
    %v2071 = vmul.f32 %v1570, 0.0625
    %v2072 = vcvt.f32.f8e4m3b11 %v2071
    %vm2073 = vweird.f32 %v1570
    %v2074 = vsel %vm2073, 127, %v2072
    %v2075 = vshrl.u32 %v1570, 24
    %v2076 = vand.u32 %v2075, 128
    %vm2077 = vcmp.le.f32.partialorder %v2070, 0.0009765625
    %v2078 = vsel %vm2077, %v2076, %v2074
    %v2079 = vand.u32 2147483647, %v1571
    %v2080 = vmul.f32 %v1571, 0.0625
    %v2081 = vcvt.f32.f8e4m3b11 %v2080
    %vm2082 = vweird.f32 %v1571
    %v2083 = vsel %vm2082, 127, %v2081
    %v2084 = vshrl.u32 %v1571, 24
    %v2085 = vand.u32 %v2084, 128
    %vm2086 = vcmp.le.f32.partialorder %v2079, 0.0009765625
    %v2087 = vsel %vm2086, %v2085, %v2083
    %v2088 = vpack.c.b16 %v2069, %v2060
    %v2089 = vpack.c.b16 %v2087, %v2078
    %v2090 = vpack.c.b8 %v2089, %v2088
    %v2092 = vand.u32 2147483647, %v1476
    %v2093 = vmul.f32 %v1476, 0.0625
    %v2094 = vcvt.f32.f8e4m3b11 %v2093
    %vm2095 = vweird.f32 %v1476
    %v2096 = vsel %vm2095, 127, %v2094
    %v2097 = vshrl.u32 %v1476, 24
    %v2098 = vand.u32 %v2097, 128
    %vm2099 = vcmp.le.f32.partialorder %v2092, 0.0009765625
    %v2100 = vsel %vm2099, %v2098, %v2096
    %v2101 = vand.u32 2147483647, %v1477
    %v2102 = vmul.f32 %v1477, 0.0625
    %v2103 = vcvt.f32.f8e4m3b11 %v2102
    %vm2104 = vweird.f32 %v1477
    %v2105 = vsel %vm2104, 127, %v2103
    %v2106 = vshrl.u32 %v1477, 24
    %v2107 = vand.u32 %v2106, 128
    %vm2108 = vcmp.le.f32.partialorder %v2101, 0.0009765625
    %v2109 = vsel %vm2108, %v2107, %v2105
    %v2110 = vand.u32 2147483647, %v1478
    %v2111 = vmul.f32 %v1478, 0.0625
    %v2112 = vcvt.f32.f8e4m3b11 %v2111
    %vm2113 = vweird.f32 %v1478
    %v2114 = vsel %vm2113, 127, %v2112
    %v2115 = vshrl.u32 %v1478, 24
    %v2116 = vand.u32 %v2115, 128
    %vm2117 = vcmp.le.f32.partialorder %v2110, 0.0009765625
    %v2118 = vsel %vm2117, %v2116, %v2114
    %v2119 = vand.u32 2147483647, %v1479
    %v2120 = vmul.f32 %v1479, 0.0625
    %v2121 = vcvt.f32.f8e4m3b11 %v2120
    %vm2122 = vweird.f32 %v1479
    %v2123 = vsel %vm2122, 127, %v2121
    %v2124 = vshrl.u32 %v1479, 24
    %v2125 = vand.u32 %v2124, 128
    %vm2126 = vcmp.le.f32.partialorder %v2119, 0.0009765625
    %v2127 = vsel %vm2126, %v2125, %v2123
    %v2128 = vpack.c.b16 %v2109, %v2100
    %v2129 = vpack.c.b16 %v2127, %v2118
    %v2130 = vpack.c.b8 %v2129, %v2128
    %v2132 = vand.u32 2147483647, %v1572
    %v2133 = vmul.f32 %v1572, 0.0625
    %v2134 = vcvt.f32.f8e4m3b11 %v2133
    %vm2135 = vweird.f32 %v1572
    %v2136 = vsel %vm2135, 127, %v2134
    %v2137 = vshrl.u32 %v1572, 24
    %v2138 = vand.u32 %v2137, 128
    %vm2139 = vcmp.le.f32.partialorder %v2132, 0.0009765625
    %v2140 = vsel %vm2139, %v2138, %v2136
    %v2141 = vand.u32 2147483647, %v1573
    %v2142 = vmul.f32 %v1573, 0.0625
    %v2143 = vcvt.f32.f8e4m3b11 %v2142
    %vm2144 = vweird.f32 %v1573
    %v2145 = vsel %vm2144, 127, %v2143
    %v2146 = vshrl.u32 %v1573, 24
    %v2147 = vand.u32 %v2146, 128
    %vm2148 = vcmp.le.f32.partialorder %v2141, 0.0009765625
    %v2149 = vsel %vm2148, %v2147, %v2145
    %v2150 = vand.u32 2147483647, %v1574
    %v2151 = vmul.f32 %v1574, 0.0625
    %v2152 = vcvt.f32.f8e4m3b11 %v2151
    %vm2153 = vweird.f32 %v1574
    %v2154 = vsel %vm2153, 127, %v2152
    %v2155 = vshrl.u32 %v1574, 24
    %v2156 = vand.u32 %v2155, 128
    %vm2157 = vcmp.le.f32.partialorder %v2150, 0.0009765625
    %v2158 = vsel %vm2157, %v2156, %v2154
    %v2159 = vand.u32 2147483647, %v1575
    %v2160 = vmul.f32 %v1575, 0.0625
    %v2161 = vcvt.f32.f8e4m3b11 %v2160
    %vm2162 = vweird.f32 %v1575
    %v2163 = vsel %vm2162, 127, %v2161
    %v2164 = vshrl.u32 %v1575, 24
    %v2165 = vand.u32 %v2164, 128
    %vm2166 = vcmp.le.f32.partialorder %v2159, 0.0009765625
    %v2167 = vsel %vm2166, %v2165, %v2163
    %v2168 = vpack.c.b16 %v2149, %v2140
    %v2169 = vpack.c.b16 %v2167, %v2158
    %v2170 = vpack.c.b8 %v2169, %v2168
    %v2172 = vand.u32 2147483647, %v1480
    %v2173 = vmul.f32 %v1480, 0.0625
    %v2174 = vcvt.f32.f8e4m3b11 %v2173
    %vm2175 = vweird.f32 %v1480
    %v2176 = vsel %vm2175, 127, %v2174
    %v2177 = vshrl.u32 %v1480, 24
    %v2178 = vand.u32 %v2177, 128
    %vm2179 = vcmp.le.f32.partialorder %v2172, 0.0009765625
    %v2180 = vsel %vm2179, %v2178, %v2176
    %v2181 = vand.u32 2147483647, %v1481
    %v2182 = vmul.f32 %v1481, 0.0625
    %v2183 = vcvt.f32.f8e4m3b11 %v2182
    %vm2184 = vweird.f32 %v1481
    %v2185 = vsel %vm2184, 127, %v2183
    %v2186 = vshrl.u32 %v1481, 24
    %v2187 = vand.u32 %v2186, 128
    %vm2188 = vcmp.le.f32.partialorder %v2181, 0.0009765625
    %v2189 = vsel %vm2188, %v2187, %v2185
    %v2190 = vand.u32 2147483647, %v1482
    %v2191 = vmul.f32 %v1482, 0.0625
    %v2192 = vcvt.f32.f8e4m3b11 %v2191
    %vm2193 = vweird.f32 %v1482
    %v2194 = vsel %vm2193, 127, %v2192
    %v2195 = vshrl.u32 %v1482, 24
    %v2196 = vand.u32 %v2195, 128
    %vm2197 = vcmp.le.f32.partialorder %v2190, 0.0009765625
    %v2198 = vsel %vm2197, %v2196, %v2194
    %v2199 = vand.u32 2147483647, %v1483
    %v2200 = vmul.f32 %v1483, 0.0625
    %v2201 = vcvt.f32.f8e4m3b11 %v2200
    %vm2202 = vweird.f32 %v1483
    %v2203 = vsel %vm2202, 127, %v2201
    %v2204 = vshrl.u32 %v1483, 24
    %v2205 = vand.u32 %v2204, 128
    %vm2206 = vcmp.le.f32.partialorder %v2199, 0.0009765625
    %v2207 = vsel %vm2206, %v2205, %v2203
    %v2208 = vpack.c.b16 %v2189, %v2180
    %v2209 = vpack.c.b16 %v2207, %v2198
    %v2210 = vpack.c.b8 %v2209, %v2208
    %v2212 = vand.u32 2147483647, %v1576
    %v2213 = vmul.f32 %v1576, 0.0625
    %v2214 = vcvt.f32.f8e4m3b11 %v2213
    %vm2215 = vweird.f32 %v1576
    %v2216 = vsel %vm2215, 127, %v2214
    %v2217 = vshrl.u32 %v1576, 24
    %v2218 = vand.u32 %v2217, 128
    %vm2219 = vcmp.le.f32.partialorder %v2212, 0.0009765625
    %v2220 = vsel %vm2219, %v2218, %v2216
    %v2221 = vand.u32 2147483647, %v1577
    %v2222 = vmul.f32 %v1577, 0.0625
    %v2223 = vcvt.f32.f8e4m3b11 %v2222
    %vm2224 = vweird.f32 %v1577
    %v2225 = vsel %vm2224, 127, %v2223
    %v2226 = vshrl.u32 %v1577, 24
    %v2227 = vand.u32 %v2226, 128
    %vm2228 = vcmp.le.f32.partialorder %v2221, 0.0009765625
    %v2229 = vsel %vm2228, %v2227, %v2225
    %v2230 = vand.u32 2147483647, %v1578
    %v2231 = vmul.f32 %v1578, 0.0625
    %v2232 = vcvt.f32.f8e4m3b11 %v2231
    %vm2233 = vweird.f32 %v1578
    %v2234 = vsel %vm2233, 127, %v2232
    %v2235 = vshrl.u32 %v1578, 24
    %v2236 = vand.u32 %v2235, 128
    %vm2237 = vcmp.le.f32.partialorder %v2230, 0.0009765625
    %v2238 = vsel %vm2237, %v2236, %v2234
    %v2239 = vand.u32 2147483647, %v1579
    %v2240 = vmul.f32 %v1579, 0.0625
    %v2241 = vcvt.f32.f8e4m3b11 %v2240
    %vm2242 = vweird.f32 %v1579
    %v2243 = vsel %vm2242, 127, %v2241
    %v2244 = vshrl.u32 %v1579, 24
    %v2245 = vand.u32 %v2244, 128
    %vm2246 = vcmp.le.f32.partialorder %v2239, 0.0009765625
    %v2247 = vsel %vm2246, %v2245, %v2243
    %v2248 = vpack.c.b16 %v2229, %v2220
    %v2249 = vpack.c.b16 %v2247, %v2238
    %v2250 = vpack.c.b8 %v2249, %v2248
    %v2252 = vand.u32 2147483647, %v1500
    %v2253 = vmul.f32 %v1500, 0.0625
    %v2254 = vcvt.f32.f8e4m3b11 %v2253
    %vm2255 = vweird.f32 %v1500
    %v2256 = vsel %vm2255, 127, %v2254
    %v2257 = vshrl.u32 %v1500, 24
    %v2258 = vand.u32 %v2257, 128
    %vm2259 = vcmp.le.f32.partialorder %v2252, 0.0009765625
    %v2260 = vsel %vm2259, %v2258, %v2256
    %v2261 = vand.u32 2147483647, %v1501
    %v2262 = vmul.f32 %v1501, 0.0625
    %v2263 = vcvt.f32.f8e4m3b11 %v2262
    %vm2264 = vweird.f32 %v1501
    %v2265 = vsel %vm2264, 127, %v2263
    %v2266 = vshrl.u32 %v1501, 24
    %v2267 = vand.u32 %v2266, 128
    %vm2268 = vcmp.le.f32.partialorder %v2261, 0.0009765625
    %v2269 = vsel %vm2268, %v2267, %v2265
    %v2270 = vand.u32 2147483647, %v1502
    %v2271 = vmul.f32 %v1502, 0.0625
    %v2272 = vcvt.f32.f8e4m3b11 %v2271
    %vm2273 = vweird.f32 %v1502
    %v2274 = vsel %vm2273, 127, %v2272
    %v2275 = vshrl.u32 %v1502, 24
    %v2276 = vand.u32 %v2275, 128
    %vm2277 = vcmp.le.f32.partialorder %v2270, 0.0009765625
    %v2278 = vsel %vm2277, %v2276, %v2274
    %v2279 = vand.u32 2147483647, %v1503
    %v2280 = vmul.f32 %v1503, 0.0625
    %v2281 = vcvt.f32.f8e4m3b11 %v2280
    %vm2282 = vweird.f32 %v1503
    %v2283 = vsel %vm2282, 127, %v2281
    %v2284 = vshrl.u32 %v1503, 24
    %v2285 = vand.u32 %v2284, 128
    %vm2286 = vcmp.le.f32.partialorder %v2279, 0.0009765625
    %v2287 = vsel %vm2286, %v2285, %v2283
    %v2288 = vpack.c.b16 %v2269, %v2260
    %v2289 = vpack.c.b16 %v2287, %v2278
    %v2290 = vpack.c.b8 %v2289, %v2288
    %v2292 = vand.u32 2147483647, %v1596
    %v2293 = vmul.f32 %v1596, 0.0625
    %v2294 = vcvt.f32.f8e4m3b11 %v2293
    %vm2295 = vweird.f32 %v1596
    %v2296 = vsel %vm2295, 127, %v2294
    %v2297 = vshrl.u32 %v1596, 24
    %v2298 = vand.u32 %v2297, 128
    %vm2299 = vcmp.le.f32.partialorder %v2292, 0.0009765625
    %v2300 = vsel %vm2299, %v2298, %v2296
    %v2301 = vand.u32 2147483647, %v1597
    %v2302 = vmul.f32 %v1597, 0.0625
    %v2303 = vcvt.f32.f8e4m3b11 %v2302
    %vm2304 = vweird.f32 %v1597
    %v2305 = vsel %vm2304, 127, %v2303
    %v2306 = vshrl.u32 %v1597, 24
    %v2307 = vand.u32 %v2306, 128
    %vm2308 = vcmp.le.f32.partialorder %v2301, 0.0009765625
    %v2309 = vsel %vm2308, %v2307, %v2305
    %v2310 = vand.u32 2147483647, %v1598
    %v2311 = vmul.f32 %v1598, 0.0625
    %v2312 = vcvt.f32.f8e4m3b11 %v2311
    %vm2313 = vweird.f32 %v1598
    %v2314 = vsel %vm2313, 127, %v2312
    %v2315 = vshrl.u32 %v1598, 24
    %v2316 = vand.u32 %v2315, 128
    %vm2317 = vcmp.le.f32.partialorder %v2310, 0.0009765625
    %v2318 = vsel %vm2317, %v2316, %v2314
    %v2319 = vand.u32 2147483647, %v1599
    %v2320 = vmul.f32 %v1599, 0.0625
    %v2321 = vcvt.f32.f8e4m3b11 %v2320
    %vm2322 = vweird.f32 %v1599
    %v2323 = vsel %vm2322, 127, %v2321
    %v2324 = vshrl.u32 %v1599, 24
    %v2325 = vand.u32 %v2324, 128
    %vm2326 = vcmp.le.f32.partialorder %v2319, 0.0009765625
    %v2327 = vsel %vm2326, %v2325, %v2323
    %v2328 = vpack.c.b16 %v2309, %v2300
    %v2329 = vpack.c.b16 %v2327, %v2318
    %v2330 = vpack.c.b8 %v2329, %v2328
    %v2332 = vand.u32 2147483647, %v1504
    %v2333 = vmul.f32 %v1504, 0.0625
    %v2334 = vcvt.f32.f8e4m3b11 %v2333
    %vm2335 = vweird.f32 %v1504
    %v2336 = vsel %vm2335, 127, %v2334
    %v2337 = vshrl.u32 %v1504, 24
    %v2338 = vand.u32 %v2337, 128
    %vm2339 = vcmp.le.f32.partialorder %v2332, 0.0009765625
    %v2340 = vsel %vm2339, %v2338, %v2336
    %v2341 = vand.u32 2147483647, %v1505
    %v2342 = vmul.f32 %v1505, 0.0625
    %v2343 = vcvt.f32.f8e4m3b11 %v2342
    %vm2344 = vweird.f32 %v1505
    %v2345 = vsel %vm2344, 127, %v2343
    %v2346 = vshrl.u32 %v1505, 24
    %v2347 = vand.u32 %v2346, 128
    %vm2348 = vcmp.le.f32.partialorder %v2341, 0.0009765625
    %v2349 = vsel %vm2348, %v2347, %v2345
    %v2350 = vand.u32 2147483647, %v1506
    %v2351 = vmul.f32 %v1506, 0.0625
    %v2352 = vcvt.f32.f8e4m3b11 %v2351
    %vm2353 = vweird.f32 %v1506
    %v2354 = vsel %vm2353, 127, %v2352
    %v2355 = vshrl.u32 %v1506, 24
    %v2356 = vand.u32 %v2355, 128
    %vm2357 = vcmp.le.f32.partialorder %v2350, 0.0009765625
    %v2358 = vsel %vm2357, %v2356, %v2354
    %v2359 = vand.u32 2147483647, %v1507
    %v2360 = vmul.f32 %v1507, 0.0625
    %v2361 = vcvt.f32.f8e4m3b11 %v2360
    %vm2362 = vweird.f32 %v1507
    %v2363 = vsel %vm2362, 127, %v2361
    %v2364 = vshrl.u32 %v1507, 24
    %v2365 = vand.u32 %v2364, 128
    %vm2366 = vcmp.le.f32.partialorder %v2359, 0.0009765625
    %v2367 = vsel %vm2366, %v2365, %v2363
    %v2368 = vpack.c.b16 %v2349, %v2340
    %v2369 = vpack.c.b16 %v2367, %v2358
    %v2370 = vpack.c.b8 %v2369, %v2368
    %v2372 = vand.u32 2147483647, %v1600
    %v2373 = vmul.f32 %v1600, 0.0625
    %v2374 = vcvt.f32.f8e4m3b11 %v2373
    %vm2375 = vweird.f32 %v1600
    %v2376 = vsel %vm2375, 127, %v2374
    %v2377 = vshrl.u32 %v1600, 24
    %v2378 = vand.u32 %v2377, 128
    %vm2379 = vcmp.le.f32.partialorder %v2372, 0.0009765625
    %v2380 = vsel %vm2379, %v2378, %v2376
    %v2381 = vand.u32 2147483647, %v1601
    %v2382 = vmul.f32 %v1601, 0.0625
    %v2383 = vcvt.f32.f8e4m3b11 %v2382
    %vm2384 = vweird.f32 %v1601
    %v2385 = vsel %vm2384, 127, %v2383
    %v2386 = vshrl.u32 %v1601, 24
    %v2387 = vand.u32 %v2386, 128
    %vm2388 = vcmp.le.f32.partialorder %v2381, 0.0009765625
    %v2389 = vsel %vm2388, %v2387, %v2385
    %v2390 = vand.u32 2147483647, %v1602
    %v2391 = vmul.f32 %v1602, 0.0625
    %v2392 = vcvt.f32.f8e4m3b11 %v2391
    %vm2393 = vweird.f32 %v1602
    %v2394 = vsel %vm2393, 127, %v2392
    %v2395 = vshrl.u32 %v1602, 24
    %v2396 = vand.u32 %v2395, 128
    %vm2397 = vcmp.le.f32.partialorder %v2390, 0.0009765625
    %v2398 = vsel %vm2397, %v2396, %v2394
    %v2399 = vand.u32 2147483647, %v1603
    %v2400 = vmul.f32 %v1603, 0.0625
    %v2401 = vcvt.f32.f8e4m3b11 %v2400
    %vm2402 = vweird.f32 %v1603
    %v2403 = vsel %vm2402, 127, %v2401
    %v2404 = vshrl.u32 %v1603, 24
    %v2405 = vand.u32 %v2404, 128
    %vm2406 = vcmp.le.f32.partialorder %v2399, 0.0009765625
    %v2407 = vsel %vm2406, %v2405, %v2403
    %v2408 = vpack.c.b16 %v2389, %v2380
    %v2409 = vpack.c.b16 %v2407, %v2398
    %v2410 = vpack.c.b8 %v2409, %v2408
    %v2412 = vand.u32 2147483647, %v1508
    %v2413 = vmul.f32 %v1508, 0.0625
    %v2414 = vcvt.f32.f8e4m3b11 %v2413
    %vm2415 = vweird.f32 %v1508
    %v2416 = vsel %vm2415, 127, %v2414
    %v2417 = vshrl.u32 %v1508, 24
    %v2418 = vand.u32 %v2417, 128
    %vm2419 = vcmp.le.f32.partialorder %v2412, 0.0009765625
    %v2420 = vsel %vm2419, %v2418, %v2416
    %v2421 = vand.u32 2147483647, %v1509
    %v2422 = vmul.f32 %v1509, 0.0625
    %v2423 = vcvt.f32.f8e4m3b11 %v2422
    %vm2424 = vweird.f32 %v1509
    %v2425 = vsel %vm2424, 127, %v2423
    %v2426 = vshrl.u32 %v1509, 24
    %v2427 = vand.u32 %v2426, 128
    %vm2428 = vcmp.le.f32.partialorder %v2421, 0.0009765625
    %v2429 = vsel %vm2428, %v2427, %v2425
    %v2430 = vand.u32 2147483647, %v1510
    %v2431 = vmul.f32 %v1510, 0.0625
    %v2432 = vcvt.f32.f8e4m3b11 %v2431
    %vm2433 = vweird.f32 %v1510
    %v2434 = vsel %vm2433, 127, %v2432
    %v2435 = vshrl.u32 %v1510, 24
    %v2436 = vand.u32 %v2435, 128
    %vm2437 = vcmp.le.f32.partialorder %v2430, 0.0009765625
    %v2438 = vsel %vm2437, %v2436, %v2434
    %v2439 = vand.u32 2147483647, %v1511
    %v2440 = vmul.f32 %v1511, 0.0625
    %v2441 = vcvt.f32.f8e4m3b11 %v2440
    %vm2442 = vweird.f32 %v1511
    %v2443 = vsel %vm2442, 127, %v2441
    %v2444 = vshrl.u32 %v1511, 24
    %v2445 = vand.u32 %v2444, 128
    %vm2446 = vcmp.le.f32.partialorder %v2439, 0.0009765625
    %v2447 = vsel %vm2446, %v2445, %v2443
    %v2448 = vpack.c.b16 %v2429, %v2420
    %v2449 = vpack.c.b16 %v2447, %v2438
    %v2450 = vpack.c.b8 %v2449, %v2448
    %v2452 = vand.u32 2147483647, %v1604
    %v2453 = vmul.f32 %v1604, 0.0625
    %v2454 = vcvt.f32.f8e4m3b11 %v2453
    %vm2455 = vweird.f32 %v1604
    %v2456 = vsel %vm2455, 127, %v2454
    %v2457 = vshrl.u32 %v1604, 24
    %v2458 = vand.u32 %v2457, 128
    %vm2459 = vcmp.le.f32.partialorder %v2452, 0.0009765625
    %v2460 = vsel %vm2459, %v2458, %v2456
    %v2461 = vand.u32 2147483647, %v1605
    %v2462 = vmul.f32 %v1605, 0.0625
    %v2463 = vcvt.f32.f8e4m3b11 %v2462
    %vm2464 = vweird.f32 %v1605
    %v2465 = vsel %vm2464, 127, %v2463
    %v2466 = vshrl.u32 %v1605, 24
    %v2467 = vand.u32 %v2466, 128
    %vm2468 = vcmp.le.f32.partialorder %v2461, 0.0009765625
    %v2469 = vsel %vm2468, %v2467, %v2465
    %v2470 = vand.u32 2147483647, %v1606
    %v2471 = vmul.f32 %v1606, 0.0625
    %v2472 = vcvt.f32.f8e4m3b11 %v2471
    %vm2473 = vweird.f32 %v1606
    %v2474 = vsel %vm2473, 127, %v2472
    %v2475 = vshrl.u32 %v1606, 24
    %v2476 = vand.u32 %v2475, 128
    %vm2477 = vcmp.le.f32.partialorder %v2470, 0.0009765625
    %v2478 = vsel %vm2477, %v2476, %v2474
    %v2479 = vand.u32 2147483647, %v1607
    %v2480 = vmul.f32 %v1607, 0.0625
    %v2481 = vcvt.f32.f8e4m3b11 %v2480
    %vm2482 = vweird.f32 %v1607
    %v2483 = vsel %vm2482, 127, %v2481
    %v2484 = vshrl.u32 %v1607, 24
    %v2485 = vand.u32 %v2484, 128
    %vm2486 = vcmp.le.f32.partialorder %v2479, 0.0009765625
    %v2487 = vsel %vm2486, %v2485, %v2483
    %v2488 = vpack.c.b16 %v2469, %v2460
    %v2489 = vpack.c.b16 %v2487, %v2478
    %v2490 = vpack.c.b8 %v2489, %v2488
    %v2492 = vand.u32 2147483647, %v1512
    %v2493 = vmul.f32 %v1512, 0.0625
    %v2494 = vcvt.f32.f8e4m3b11 %v2493
    %vm2495 = vweird.f32 %v1512
    %v2496 = vsel %vm2495, 127, %v2494
    %v2497 = vshrl.u32 %v1512, 24
    %v2498 = vand.u32 %v2497, 128
    %vm2499 = vcmp.le.f32.partialorder %v2492, 0.0009765625
    %v2500 = vsel %vm2499, %v2498, %v2496
    %v2501 = vand.u32 2147483647, %v1513
    %v2502 = vmul.f32 %v1513, 0.0625
    %v2503 = vcvt.f32.f8e4m3b11 %v2502
    %vm2504 = vweird.f32 %v1513
    %v2505 = vsel %vm2504, 127, %v2503
    %v2506 = vshrl.u32 %v1513, 24
    %v2507 = vand.u32 %v2506, 128
    %vm2508 = vcmp.le.f32.partialorder %v2501, 0.0009765625
    %v2509 = vsel %vm2508, %v2507, %v2505
    %v2510 = vand.u32 2147483647, %v1514
    %v2511 = vmul.f32 %v1514, 0.0625
    %v2512 = vcvt.f32.f8e4m3b11 %v2511
    %vm2513 = vweird.f32 %v1514
    %v2514 = vsel %vm2513, 127, %v2512
    %v2515 = vshrl.u32 %v1514, 24
    %v2516 = vand.u32 %v2515, 128
    %vm2517 = vcmp.le.f32.partialorder %v2510, 0.0009765625
    %v2518 = vsel %vm2517, %v2516, %v2514
    %v2519 = vand.u32 2147483647, %v1515
    %v2520 = vmul.f32 %v1515, 0.0625
    %v2521 = vcvt.f32.f8e4m3b11 %v2520
    %vm2522 = vweird.f32 %v1515
    %v2523 = vsel %vm2522, 127, %v2521
    %v2524 = vshrl.u32 %v1515, 24
    %v2525 = vand.u32 %v2524, 128
    %vm2526 = vcmp.le.f32.partialorder %v2519, 0.0009765625
    %v2527 = vsel %vm2526, %v2525, %v2523
    %v2528 = vpack.c.b16 %v2509, %v2500
    %v2529 = vpack.c.b16 %v2527, %v2518
    %v2530 = vpack.c.b8 %v2529, %v2528
    %v2532 = vand.u32 2147483647, %v1608
    %v2533 = vmul.f32 %v1608, 0.0625
    %v2534 = vcvt.f32.f8e4m3b11 %v2533
    %vm2535 = vweird.f32 %v1608
    %v2536 = vsel %vm2535, 127, %v2534
    %v2537 = vshrl.u32 %v1608, 24
    %v2538 = vand.u32 %v2537, 128
    %vm2539 = vcmp.le.f32.partialorder %v2532, 0.0009765625
    %v2540 = vsel %vm2539, %v2538, %v2536
    %v2541 = vand.u32 2147483647, %v1609
    %v2542 = vmul.f32 %v1609, 0.0625
    %v2543 = vcvt.f32.f8e4m3b11 %v2542
    %vm2544 = vweird.f32 %v1609
    %v2545 = vsel %vm2544, 127, %v2543
    %v2546 = vshrl.u32 %v1609, 24
    %v2547 = vand.u32 %v2546, 128
    %vm2548 = vcmp.le.f32.partialorder %v2541, 0.0009765625
    %v2549 = vsel %vm2548, %v2547, %v2545
    %v2550 = vand.u32 2147483647, %v1610
    %v2551 = vmul.f32 %v1610, 0.0625
    %v2552 = vcvt.f32.f8e4m3b11 %v2551
    %vm2553 = vweird.f32 %v1610
    %v2554 = vsel %vm2553, 127, %v2552
    %v2555 = vshrl.u32 %v1610, 24
    %v2556 = vand.u32 %v2555, 128
    %vm2557 = vcmp.le.f32.partialorder %v2550, 0.0009765625
    %v2558 = vsel %vm2557, %v2556, %v2554
    %v2559 = vand.u32 2147483647, %v1611
    %v2560 = vmul.f32 %v1611, 0.0625
    %v2561 = vcvt.f32.f8e4m3b11 %v2560
    %vm2562 = vweird.f32 %v1611
    %v2563 = vsel %vm2562, 127, %v2561
    %v2564 = vshrl.u32 %v1611, 24
    %v2565 = vand.u32 %v2564, 128
    %vm2566 = vcmp.le.f32.partialorder %v2559, 0.0009765625
    %v2567 = vsel %vm2566, %v2565, %v2563
    %v2568 = vpack.c.b16 %v2549, %v2540
    %v2569 = vpack.c.b16 %v2567, %v2558
    %v2570 = vpack.c.b8 %v2569, %v2568
    %2572 = vst [vmem:[#allocation7] sm:$0xff] %v1650
    %2573 = vst [vmem:[#allocation7 + $0x8] sm:$0xff] %v1690
    %2574 = vst [vmem:[#allocation7 + $0x10] sm:$0xff] %v1730
    %2575 = vst [vmem:[#allocation7 + $0x18] sm:$0xff] %v1770
    %2576 = vst [vmem:[#allocation7 + $0x20] sm:$0xff] %v1810
    %2577 = vst [vmem:[#allocation7 + $0x28] sm:$0xff] %v1850
    %2578 = vst [vmem:[#allocation7 + $0x30] sm:$0xff] %v1890
    %2579 = vst [vmem:[#allocation7 + $0x38] sm:$0xff] %v1930
    %2580 = vst [vmem:[#allocation7 + $0x40] sm:$0xff] %v1970
    %2581 = vst [vmem:[#allocation7 + $0x48] sm:$0xff] %v2010
    %2582 = vst [vmem:[#allocation7 + $0x50] sm:$0xff] %v2050
    %2583 = vst [vmem:[#allocation7 + $0x58] sm:$0xff] %v2090
    %2584 = vst [vmem:[#allocation7 + $0x60] sm:$0xff] %v2130
    %2585 = vst [vmem:[#allocation7 + $0x68] sm:$0xff] %v2170
    %2586 = vst [vmem:[#allocation7 + $0x70] sm:$0xff] %v2210
    %2587 = vst [vmem:[#allocation7 + $0x78] sm:$0xff] %v2250
    %2588 = vst [vmem:[#allocation7 + $0x80] sm:$0xff] %v2290
    %2589 = vst [vmem:[#allocation7 + $0x88] sm:$0xff] %v2330
    %2590 = vst [vmem:[#allocation7 + $0x90] sm:$0xff] %v2370
    %2591 = vst [vmem:[#allocation7 + $0x98] sm:$0xff] %v2410
    %2592 = vst [vmem:[#allocation7 + $0xa0] sm:$0xff] %v2450
    %2593 = vst [vmem:[#allocation7 + $0xa8] sm:$0xff] %v2490
    %2594 = vst [vmem:[#allocation7 + $0xb0] sm:$0xff] %v2530
    %2595 = vst [vmem:[#allocation7 + $0xb8] sm:$0xff] %v2570
    // Predicated region
    $region14: #{fp8_division_transpose.3} parent=1 // pred_check
      _
    $region15: #{fp8_division_transpose.3} parent=1 // pred_check_branch
      %2597 = sbr.rel (0) target = $region17
    $region16: #{fp8_division_transpose.3} parent=1 // pred_region
      %2599 = vsyncadd [#allocation5], 0
      %s2600 = sshll.u32 [#allocation6], 4
      %s2601 = int_to_ptr.vmem [resolvable:$true] %s2600
      %s2602 = sshll.u32 %s2, 4
      %s2603 = int_to_ptr.hbm [resolvable:$true] %s2602
      %2608 = dma.vmem_to_hbm [thread:$0]  %s2601, 3072, %s2603, [#allocation5], 384, 384, 24
    $region17: #{fp8_division_transpose.3} parent=1 // pred_fallthru
      _
    // Predicated region
    $region18: #{fp8_division_transpose.3} parent=1 // pred_check
      _
    $region19: #{fp8_division_transpose.3} parent=1 // pred_check_branch
      %2610 = sbr.rel (0) target = $region21
    $region20: #{fp8_division_transpose.3} parent=1 // pred_region
      %2612 = vsyncadd [#allocation8], 0
      %s2613 = sshll.u32 [#allocation7], 4
      %s2614 = int_to_ptr.vmem [resolvable:$true] %s2613
      %s2615 = sshll.u32 %s3, 4
      %s2616 = int_to_ptr.hbm [resolvable:$true] %s2615
      %2621 = dma.vmem_to_hbm [thread:$0]  %s2614, 3072, %s2616, [#allocation8], 256, 256, 16
    $region21: #{fp8_division_transpose.3} parent=1 // pred_fallthru
      _
    // Predicated region
    $region22: #{fp8_division_transpose.3} parent=1 // pred_check
      _
    $region23: #{fp8_division_transpose.3} parent=1 // pred_check_branch
      %2623 = sbr.rel (0) target = $region25
    $region24: #{fp8_division_transpose.3} parent=1 // pred_region
      %2625 = dma.done [#allocation5], 3072
    $region25: #{fp8_division_transpose.3} parent=1 // pred_fallthru
      _
    // Predicated region
    $region26: #{fp8_division_transpose.3} parent=1 // pred_check
      _
    $region27: #{fp8_division_transpose.3} parent=1 // pred_check_branch
      %2627 = sbr.rel (0) target = $region29
    $region28: #{fp8_division_transpose.3} parent=1 // pred_region
      %2629 = dma.done [#allocation8], 3072
    $region29: #{fp8_division_transpose.3} parent=1 // pred_fallthru
      _
    %2630 = vsyncpa [#allocation4], 1
    %2631 = vsyncpa [#allocation5], 1
    %2632 = vsyncpa [#allocation8], 1

</llo_original>
